<compile_context>
chip_gen: v5e
topology: v5e:2x2
jax: 0.10.0
libtpu: 0.0.40
codegen_flags: <defaults>
</compile_context>

<pallas_src>
import functools

import jax
import jax.numpy as jnp
from jax import lax
from jax.experimental import pallas as pl
from jax.experimental.pallas import tpu as pltpu

HIDDEN = 32        # output_dim / hidden_dim of Res_Stack / Res_Unit
KSIZE = 5          # Res_Unit Conv1d kernel_size
PAD = 2            # 'same' padding for k=5, stride=1
EPS = 1e-5         # BatchNorm1d eps
MXU_DTYPE = jnp.bfloat16   # bf16 MXU operands, f32 accumulation (review item 2)


# ---------------------------------------------------------------------------
# Fused Pallas kernel: conv1x1+BN -> n_units x Res_Unit -> pairwise max (pool)
# ---------------------------------------------------------------------------
def _res_stack_kernel(x_ref, w0_ref, w5_ref, vec_ref, o_ref,
                      *, n_units, seq_len, n_valid):
    f32 = jnp.float32
    C = w0_ref.shape[0]            # 32 channels (sublanes)
    NLP = x_ref.shape[1]           # N*L padded to a multiple of 128 (lanes)
    L = seq_len

    # ---- hoisted lane-position constants (computed once, reused) ----------
    lane = lax.broadcasted_iota(jnp.int32, (C, NLP), 1)
    pos = lane % L                                  # position within a sample
    valid = (lane < n_valid).astype(f32)            # 1.0 on real data lanes
    # Tap offset d is usable at flat position p iff the neighbour stays inside
    # the same sample: 0 <= (p mod L) + d < L.  (No wraparound can reach a
    # masked-in position, see derivation in the wrapper comment.)
    tap_mask = {d: jnp.logical_and(pos + d >= 0, pos + d < L).astype(f32)
                for d in range(-PAD, PAD + 1) if d != 0}

    vecs = vec_ref[...]                              # (n_vec, C, 1) f32

    def shift(h, d):
        # result[:, p] = h[:, (p + d) % NLP]  -- XLU lane rotate (jnp.roll
        # semantics), non-negative static shift.
        return pltpu.roll(h, (-d) % NLP, axis=1)

    def conv5(h, w2d):
        # ONE (C, K*C) @ (K*C, NLP) MXU matmul per conv; slab built from 4
        # XLU rotates + hoisted multiplicative boundary masks.
        # TODO(synk): a PAD-lane halo layout would reduce the 4 mask multiplies
        # per conv to 1 (optional review item); not needed at this size.
        taps = []
        for k in range(KSIZE):
            d = k - PAD
            taps.append(h if d == 0 else shift(h, d) * tap_mask[d])
        slab = jnp.concatenate(taps, axis=0)         # (K*C, NLP), sublane concat
        return jnp.dot(w2d, slab.astype(MXU_DTYPE), preferred_element_type=f32)

    inv_n = 1.0 / n_valid                            # true element count N*L

    def bn(h, gamma, beta):
        # Training-mode BatchNorm1d: batch stats over the valid lanes only,
        # biased variance (centered, f32), applied as one per-channel affine.
        hv = h * valid
        mean = jnp.sum(hv, axis=1, keepdims=True) * inv_n          # (C, 1)
        cen = (h - mean) * valid
        var = jnp.sum(cen * cen, axis=1, keepdims=True) * inv_n
        scale = lax.rsqrt(var + EPS) * gamma                       # EUP rsqrt
        return h * scale + (beta - mean * scale)

    # ---- conv1x1 + BN (conv bias exactly cancelled by the BN mean sub) ----
    x = x_ref[...]
    h = jnp.dot(w0_ref[...], x.astype(MXU_DTYPE), preferred_element_type=f32)
    h = bn(h, vecs[0], vecs[1])

    # ---- residual units, fully unrolled, activation stays vreg-resident ---
    for u in range(n_units):
        v = 2 + 5 * u
        c = conv5(h, w5_ref[2 * u]) + vecs[v]        # conv1 bias kept (ReLU<BN)
        c = jnp.maximum(c, 0.0)
        c = bn(c, vecs[v + 1], vecs[v + 2])
        c = conv5(c, w5_ref[2 * u + 1])              # conv2 bias cancelled by BN
        c = bn(c, vecs[v + 3], vecs[v + 4])
        h = c + h

    # ---- MaxPool1d(2): pairwise max here (XLU rotate); even-lane compaction
    #      is a trivial reshape in the XLA wrapper.  Output is lane-dense.
    m = jnp.maximum(h, shift(h, 1))
    o_ref[...] = m.astype(o_ref.dtype)

    # TODO(synk): BatchNorm running_mean/running_var buffer updates (training
    # side-effects that do not affect this forward's output) are not emitted.


# ---------------------------------------------------------------------------
# Wrapper: all layout plumbing / weight reshaping done here (free in XLA)
# ---------------------------------------------------------------------------
def _full_spec(a):
    nd = a.ndim
    return pl.BlockSpec(a.shape, lambda nd=nd: (0,) * nd)


def res_stack(x, params):
    """Fused Res_Stack forward.  x: (N, C_in, L) float32 (PyTorch NCL)."""
    N, c_in, L = x.shape
    assert L % 2 == 0, "MaxPool1d(2) requires an even sequence length"
    C = HIDDEN
    NL = N * L
    NLP = ((NL + 127) // 128) * 128              # lane axis padded to 128-mult
    c_in_pad = ((c_in + 7) // 8) * 8             # sublane multiple

    # activations -> channels-in-sublanes / positions-in-lanes, zero-padded.
    # (Padded lanes never leak into valid outputs: conv taps only read
    # same-sample neighbours, and BN stats are masked to valid lanes.)
    x2d = jnp.transpose(x, (1, 0, 2)).reshape(c_in, NL).astype(jnp.float32)
    x2d = jnp.pad(x2d, ((0, c_in_pad - c_in), (0, NLP - NL)))

    w0 = params["w0"].reshape(C, c_in).astype(jnp.float32)
    w0 = jnp.pad(w0, ((0, 0), (0, c_in_pad - c_in))).astype(MXU_DTYPE)

    def vec(v):                        # per-channel vectors -> (C, 1) columns
        return v.reshape(C, 1).astype(jnp.float32)

    def w5(w):                         # (C_out, C_in, K) -> (C_out, K*C_in)
        return jnp.transpose(w, (0, 2, 1)).reshape(C, KSIZE * C)

    units = params["units"]
    n_units = len(units)
    # One stacked weight slab: index 2u = unit u conv1, 2u+1 = unit u conv2.
    w5_all = jnp.stack([w5(u[k]) for u in units
                        for k in ("w1", "w2")]).astype(MXU_DTYPE)
    # One stacked per-channel vector array: [g0, be0] + per unit [b1,g1,be1,g2,be2].
    vec_list = [vec(params["g0"]), vec(params["be0"])]
    for u in units:
        vec_list += [vec(u["b1"]), vec(u["g1"]), vec(u["be1"]),
                     vec(u["g2"]), vec(u["be2"])]
    vecs = jnp.stack(vec_list)
    # params["b0"] and each unit's "b2" are intentionally not passed: a
    # per-channel constant right before a training-mode BN is exactly
    # cancelled by the mean subtraction.

    ins = (x2d, w0, w5_all, vecs)

    n_convs = 2 * n_units
    cost = pl.CostEstimate(
        flops=2 * C * c_in_pad * NL + n_convs * 2 * C * (KSIZE * C) * NL,
        transcendentals=(1 + 2 * n_units) * C,               # one rsqrt per BN channel
        bytes_accessed=int(sum(int(a.size) * a.dtype.itemsize for a in ins)
                           + C * NLP * 4),
    )

    kernel = functools.partial(_res_stack_kernel,
                               n_units=n_units, seq_len=L, n_valid=NL)
    out2d = pl.pallas_call(
        kernel,
        out_shape=jax.ShapeDtypeStruct((C, NLP), jnp.float32),
        in_specs=[_full_spec(a) for a in ins],
        out_specs=pl.BlockSpec((C, NLP), lambda: (0, 0)),
        compiler_params=pltpu.CompilerParams(vmem_limit_bytes=32 * 1024 * 1024),
        cost_estimate=cost,
        # TODO(synk): for large N*L (and the second v7x TensorCore) add a
        # lane-blocked grid with dimension_semantics=("parallel",) and split
        # the batch-stat BN into partial (sum, sumsq) accumulation + an apply
        # pass; at this problem size a grid would only add overhead.
    )(*ins)

    # Even-lane compaction of the in-kernel pairwise max == MaxPool1d(2),
    # then back to PyTorch's (N, C, L/2).
    pooled = out2d[:, :NL].reshape(C, N, L // 2, 2)[..., 0]
    return jnp.transpose(pooled, (1, 0, 2)).astype(x.dtype)


# ---------------------------------------------------------------------------
# Pure-JAX reference (lax.conv), mirrors the PyTorch module in training mode
# ---------------------------------------------------------------------------
def res_stack_ref(x, params):
    def conv(x, w, b, padding):
        out = lax.conv_general_dilated(
            x, w, window_strides=(1,), padding=padding,
            dimension_numbers=("NCH", "OIH", "NCH"))
        return out + b[None, :, None]

    def bn(x, g, be):
        m = x.mean(axis=(0, 2), keepdims=True)
        v = ((x - m) ** 2).mean(axis=(0, 2), keepdims=True)
        return (x - m) / jnp.sqrt(v + EPS) * g[None, :, None] + be[None, :, None]

    h = bn(conv(x, params["w0"], params["b0"], "VALID"),
           params["g0"], params["be0"])
    for u in params["units"]:
        c = bn(jnp.maximum(conv(h, u["w1"], u["b1"], "SAME"), 0.0),
               u["g1"], u["be1"])
        c = bn(conv(c, u["w2"], u["b2"], "SAME"), u["g2"], u["be2"])
        h = c + h
    N, C, L = h.shape
    return jnp.max(h.reshape(N, C, L // 2, 2), axis=-1)


if __name__ == "__main__":
    key = jax.random.PRNGKey(0)
    N, C_IN, L = 2, 4, 16
    C = HIDDEN

    keys = jax.random.split(key, 7)
    x = jax.random.normal(keys[0], (N, C_IN, L), dtype=jnp.float32)

    def unit_params(ks):
        return dict(
            w1=jax.random.normal(ks[0], (C, C, KSIZE), jnp.float32) * 0.2,
            b1=jax.random.normal(ks[1], (C,), jnp.float32) * 0.1,
            g1=1.0 + 0.1 * jax.random.normal(ks[2], (C,), jnp.float32),
            be1=0.1 * jax.random.normal(ks[3], (C,), jnp.float32),
            w2=jax.random.normal(ks[4], (C, C, KSIZE), jnp.float32) * 0.2,
            b2=jax.random.normal(ks[5], (C,), jnp.float32) * 0.1,
            g2=1.0 + 0.1 * jax.random.normal(ks[6], (C,), jnp.float32),
            be2=0.1 * jax.random.normal(ks[7], (C,), jnp.float32),
        )

    params = dict(
        w0=jax.random.normal(keys[1], (C, C_IN, 1), jnp.float32) * 0.5,
        b0=jax.random.normal(keys[2], (C,), jnp.float32) * 0.1,
        g0=1.0 + 0.1 * jax.random.normal(keys[3], (C,), jnp.float32),
        be0=0.1 * jax.random.normal(keys[4], (C,), jnp.float32),
        units=[unit_params(jax.random.split(keys[5], 8)),
               unit_params(jax.random.split(keys[6], 8))],
    )

    out = jax.block_until_ready(res_stack(x, params))
    ref = res_stack_ref(x, params)

    assert out.shape == (N, C, L // 2) and out.dtype == x.dtype
    # bf16 MXU operands (f32 accumulation) give ~1e-2-scale error that grows
    # slightly through 5 matmul/BN stages and the residual adds.
    assert jnp.allclose(out, ref, rtol=5e-2, atol=1e-1), "mismatch vs reference"
    print("KERNEL_OK")
</pallas_src>

<mosaic_0001>
module attributes {stable_mosaic.version = 11 : i64} {
  func.func @_res_stack_kernel(%arg0: memref<8x128xf32, #tpu.memory_space<vmem>>, %arg1: memref<32x8xbf16, #tpu.memory_space<vmem>>, %arg2: memref<4x32x160xbf16, #tpu.memory_space<vmem>>, %arg3: memref<12x32x1xf32, #tpu.memory_space<vmem>>, %arg4: memref<32x128xf32, #tpu.memory_space<vmem>>) attributes {dimension_semantics = [], scalar_prefetch = 0 : i64, scratch_operands = 0 : i64, tpu.core_type = #tpu.core_type<tc>} {
    %0 = tpu.iota {dimensions = array<i32: 1>} : vector<32x128xi32>
    %c16_i32 = arith.constant 16 : i32
    %c0_i32 = arith.constant 0 : i32
    %1 = arith.cmpi eq, %c16_i32, %c0_i32 : i32
    %c1_i32 = arith.constant 1 : i32
    %2 = arith.select %1, %c1_i32, %c16_i32 : i32
    %3 = vector.broadcast %2 : i32 to vector<32x128xi32>
    %4 = arith.remsi %0, %3 : vector<32x128xi32>
    %c0_i32_0 = arith.constant 0 : i32
    %5 = vector.broadcast %c0_i32_0 : i32 to vector<32x128xi32>
    %6 = arith.cmpi ne, %4, %5 : vector<32x128xi32>
    %c0_i32_1 = arith.constant 0 : i32
    %7 = vector.broadcast %c0_i32_1 : i32 to vector<32x128xi32>
    %8 = arith.cmpi slt, %4, %7 : vector<32x128xi32>
    %c0_i32_2 = arith.constant 0 : i32
    %9 = arith.cmpi slt, %2, %c0_i32_2 : i32
    %10 = vector.broadcast %9 : i1 to vector<32x128xi1>
    %11 = vector.broadcast %10 : vector<32x128xi1> to vector<32x128xi1>
    %12 = arith.xori %8, %11 : vector<32x128xi1>
    %13 = arith.andi %12, %6 : vector<32x128xi1>
    %14 = vector.broadcast %2 : i32 to vector<32x128xi32>
    %15 = arith.addi %4, %14 : vector<32x128xi32>
    %16 = arith.select %13, %15, %4 : vector<32x128xi1>, vector<32x128xi32>
    %c32_i32 = arith.constant 32 : i32
    %17 = vector.broadcast %c32_i32 : i32 to vector<32x128xi32>
    %18 = arith.cmpi slt, %0, %17 : vector<32x128xi32>
    %19 = arith.extui %18 : vector<32x128xi1> to vector<32x128xi32>
    %20 = arith.sitofp %19 : vector<32x128xi32> to vector<32x128xf32>
    %c-2_i32 = arith.constant -2 : i32
    %21 = vector.broadcast %c-2_i32 : i32 to vector<32x128xi32>
    %22 = arith.addi %16, %21 : vector<32x128xi32>
    %c0_i32_3 = arith.constant 0 : i32
    %23 = vector.broadcast %c0_i32_3 : i32 to vector<32x128xi32>
    %24 = arith.cmpi sge, %22, %23 : vector<32x128xi32>
    %c-2_i32_4 = arith.constant -2 : i32
    %25 = vector.broadcast %c-2_i32_4 : i32 to vector<32x128xi32>
    %26 = arith.addi %16, %25 : vector<32x128xi32>
    %c16_i32_5 = arith.constant 16 : i32
    %27 = vector.broadcast %c16_i32_5 : i32 to vector<32x128xi32>
    %28 = arith.cmpi slt, %26, %27 : vector<32x128xi32>
    %29 = arith.andi %24, %28 : vector<32x128xi1>
    %30 = arith.extui %29 : vector<32x128xi1> to vector<32x128xi32>
    %31 = arith.sitofp %30 : vector<32x128xi32> to vector<32x128xf32>
    %c-1_i32 = arith.constant -1 : i32
    %32 = vector.broadcast %c-1_i32 : i32 to vector<32x128xi32>
    %33 = arith.addi %16, %32 : vector<32x128xi32>
    %c0_i32_6 = arith.constant 0 : i32
    %34 = vector.broadcast %c0_i32_6 : i32 to vector<32x128xi32>
    %35 = arith.cmpi sge, %33, %34 : vector<32x128xi32>
    %c-1_i32_7 = arith.constant -1 : i32
    %36 = vector.broadcast %c-1_i32_7 : i32 to vector<32x128xi32>
    %37 = arith.addi %16, %36 : vector<32x128xi32>
    %c16_i32_8 = arith.constant 16 : i32
    %38 = vector.broadcast %c16_i32_8 : i32 to vector<32x128xi32>
    %39 = arith.cmpi slt, %37, %38 : vector<32x128xi32>
    %40 = arith.andi %35, %39 : vector<32x128xi1>
    %41 = arith.extui %40 : vector<32x128xi1> to vector<32x128xi32>
    %42 = arith.sitofp %41 : vector<32x128xi32> to vector<32x128xf32>
    %c1_i32_9 = arith.constant 1 : i32
    %43 = vector.broadcast %c1_i32_9 : i32 to vector<32x128xi32>
    %44 = arith.addi %16, %43 : vector<32x128xi32>
    %c0_i32_10 = arith.constant 0 : i32
    %45 = vector.broadcast %c0_i32_10 : i32 to vector<32x128xi32>
    %46 = arith.cmpi sge, %44, %45 : vector<32x128xi32>
    %c1_i32_11 = arith.constant 1 : i32
    %47 = vector.broadcast %c1_i32_11 : i32 to vector<32x128xi32>
    %48 = arith.addi %16, %47 : vector<32x128xi32>
    %c16_i32_12 = arith.constant 16 : i32
    %49 = vector.broadcast %c16_i32_12 : i32 to vector<32x128xi32>
    %50 = arith.cmpi slt, %48, %49 : vector<32x128xi32>
    %51 = arith.andi %46, %50 : vector<32x128xi1>
    %52 = arith.extui %51 : vector<32x128xi1> to vector<32x128xi32>
    %53 = arith.sitofp %52 : vector<32x128xi32> to vector<32x128xf32>
    %c2_i32 = arith.constant 2 : i32
    %54 = vector.broadcast %c2_i32 : i32 to vector<32x128xi32>
    %55 = arith.addi %16, %54 : vector<32x128xi32>
    %c0_i32_13 = arith.constant 0 : i32
    %56 = vector.broadcast %c0_i32_13 : i32 to vector<32x128xi32>
    %57 = arith.cmpi sge, %55, %56 : vector<32x128xi32>
    %c2_i32_14 = arith.constant 2 : i32
    %58 = vector.broadcast %c2_i32_14 : i32 to vector<32x128xi32>
    %59 = arith.addi %16, %58 : vector<32x128xi32>
    %c16_i32_15 = arith.constant 16 : i32
    %60 = vector.broadcast %c16_i32_15 : i32 to vector<32x128xi32>
    %61 = arith.cmpi slt, %59, %60 : vector<32x128xi32>
    %62 = arith.andi %57, %61 : vector<32x128xi1>
    %63 = arith.extui %62 : vector<32x128xi1> to vector<32x128xi32>
    %64 = arith.sitofp %63 : vector<32x128xi32> to vector<32x128xf32>
    %c0 = arith.constant 0 : index
    %c0_16 = arith.constant 0 : index
    %c0_17 = arith.constant 0 : index
    %65 = vector.load %arg3[%c0, %c0_16, %c0_17] : memref<12x32x1xf32, #tpu.memory_space<vmem>>, vector<12x32x1xf32>
    %c0_18 = arith.constant 0 : index
    %c0_19 = arith.constant 0 : index
    %66 = vector.load %arg0[%c0_18, %c0_19] : memref<8x128xf32, #tpu.memory_space<vmem>>, vector<8x128xf32>
    %c0_20 = arith.constant 0 : index
    %c0_21 = arith.constant 0 : index
    %67 = vector.load %arg1[%c0_20, %c0_21] : memref<32x8xbf16, #tpu.memory_space<vmem>>, vector<32x8xbf16>
    %68 = arith.truncf %66 : vector<8x128xf32> to vector<8x128xbf16>
    %cst = arith.constant dense<0.000000e+00> : vector<32x128xf32>
    %69 = tpu.matmul %67, %68, %cst {dimension_numbers = #tpu.dot_dimension_numbers<[1], [0], [0], [1], [0, 0, 1, 1], [], []>} : vector<32x8xbf16>, vector<8x128xbf16>, vector<32x128xf32> -> vector<32x128xf32>
    %70 = vector.extract_strided_slice %65 {offsets = [0, 0, 0], sizes = [1, 32, 1], strides = [1, 1, 1]} : vector<12x32x1xf32> to vector<1x32x1xf32>
    %71 = vector.shape_cast %70 : vector<1x32x1xf32> to vector<32x1xf32>
    %72 = vector.extract_strided_slice %65 {offsets = [1, 0, 0], sizes = [1, 32, 1], strides = [1, 1, 1]} : vector<12x32x1xf32> to vector<1x32x1xf32>
    %73 = vector.shape_cast %72 : vector<1x32x1xf32> to vector<32x1xf32>
    %74 = arith.mulf %69, %20 : vector<32x128xf32>
    %cst_22 = arith.constant dense<0.000000e+00> : vector<32xf32>
    %75 = vector.multi_reduction <add>, %74, %cst_22 [1] : vector<32x128xf32> to vector<32xf32>
    %76 = vector.shape_cast %75 : vector<32xf32> to vector<32x1xf32>
    %cst_23 = arith.constant 3.125000e-02 : f32
    %77 = vector.broadcast %cst_23 : f32 to vector<32x1xf32>
    %78 = arith.mulf %76, %77 : vector<32x1xf32>
    %79 = vector.broadcast %78 : vector<32x1xf32> to vector<32x128xf32>
    %80 = arith.subf %69, %79 : vector<32x128xf32>
    %81 = arith.mulf %80, %20 : vector<32x128xf32>
    %82 = arith.mulf %81, %81 : vector<32x128xf32>
    %cst_24 = arith.constant dense<0.000000e+00> : vector<32xf32>
    %83 = vector.multi_reduction <add>, %82, %cst_24 [1] : vector<32x128xf32> to vector<32xf32>
    %84 = vector.shape_cast %83 : vector<32xf32> to vector<32x1xf32>
    %cst_25 = arith.constant 3.125000e-02 : f32
    %85 = vector.broadcast %cst_25 : f32 to vector<32x1xf32>
    %86 = arith.mulf %84, %85 : vector<32x1xf32>
    %cst_26 = arith.constant 9.99999974E-6 : f32
    %87 = vector.broadcast %cst_26 : f32 to vector<32x1xf32>
    %88 = arith.addf %86, %87 : vector<32x1xf32>
    %89 = math.rsqrt %88 : vector<32x1xf32>
    %90 = arith.mulf %89, %71 : vector<32x1xf32>
    %91 = vector.broadcast %90 : vector<32x1xf32> to vector<32x128xf32>
    %92 = arith.mulf %69, %91 : vector<32x128xf32>
    %93 = arith.mulf %78, %90 : vector<32x1xf32>
    %94 = arith.subf %73, %93 : vector<32x1xf32>
    %95 = vector.broadcast %94 : vector<32x1xf32> to vector<32x128xf32>
    %96 = arith.addf %92, %95 : vector<32x128xf32>
    %c0_27 = arith.constant 0 : index
    %c0_28 = arith.constant 0 : index
    %c0_29 = arith.constant 0 : index
    %97 = vector.load %arg2[%c0_27, %c0_28, %c0_29] : memref<4x32x160xbf16, #tpu.memory_space<vmem>>, vector<1x32x160xbf16>
    %98 = vector.shape_cast %97 : vector<1x32x160xbf16> to vector<32x160xbf16>
    %c2_i32_30 = arith.constant 2 : i32
    %99 = tpu.dynamic_rotate %96 by %c2_i32_30 dim 1 : vector<32x128xf32>, i32 -> vector<32x128xf32>
    %100 = arith.mulf %99, %31 : vector<32x128xf32>
    %c1_i32_31 = arith.constant 1 : i32
    %101 = tpu.dynamic_rotate %96 by %c1_i32_31 dim 1 : vector<32x128xf32>, i32 -> vector<32x128xf32>
    %102 = arith.mulf %101, %42 : vector<32x128xf32>
    %c127_i32 = arith.constant 127 : i32
    %103 = tpu.dynamic_rotate %96 by %c127_i32 dim 1 : vector<32x128xf32>, i32 -> vector<32x128xf32>
    %104 = arith.mulf %103, %53 : vector<32x128xf32>
    %c126_i32 = arith.constant 126 : i32
    %105 = tpu.dynamic_rotate %96 by %c126_i32 dim 1 : vector<32x128xf32>, i32 -> vector<32x128xf32>
    %106 = arith.mulf %105, %64 : vector<32x128xf32>
    %107 = tpu.concatenate %100, %102, %96, %104, %106 in 0 : vector<32x128xf32>, vector<32x128xf32>, vector<32x128xf32>, vector<32x128xf32>, vector<32x128xf32> -> vector<160x128xf32>
    %108 = arith.truncf %107 : vector<160x128xf32> to vector<160x128xbf16>
    %cst_32 = arith.constant dense<0.000000e+00> : vector<32x128xf32>
    %109 = tpu.matmul %98, %108, %cst_32 {dimension_numbers = #tpu.dot_dimension_numbers<[1], [0], [0], [1], [0, 0, 1, 1], [], []>} : vector<32x160xbf16>, vector<160x128xbf16>, vector<32x128xf32> -> vector<32x128xf32>
    %110 = vector.extract_strided_slice %65 {offsets = [2, 0, 0], sizes = [1, 32, 1], strides = [1, 1, 1]} : vector<12x32x1xf32> to vector<1x32x1xf32>
    %111 = vector.shape_cast %110 : vector<1x32x1xf32> to vector<32x1xf32>
    %112 = vector.broadcast %111 : vector<32x1xf32> to vector<32x128xf32>
    %113 = arith.addf %109, %112 : vector<32x128xf32>
    %cst_33 = arith.constant 0.000000e+00 : f32
    %114 = vector.broadcast %cst_33 : f32 to vector<32x128xf32>
    %115 = arith.maximumf %113, %114 : vector<32x128xf32>
    %116 = vector.extract_strided_slice %65 {offsets = [3, 0, 0], sizes = [1, 32, 1], strides = [1, 1, 1]} : vector<12x32x1xf32> to vector<1x32x1xf32>
    %117 = vector.shape_cast %116 : vector<1x32x1xf32> to vector<32x1xf32>
    %118 = vector.extract_strided_slice %65 {offsets = [4, 0, 0], sizes = [1, 32, 1], strides = [1, 1, 1]} : vector<12x32x1xf32> to vector<1x32x1xf32>
    %119 = vector.shape_cast %118 : vector<1x32x1xf32> to vector<32x1xf32>
    %120 = arith.mulf %115, %20 : vector<32x128xf32>
    %cst_34 = arith.constant dense<0.000000e+00> : vector<32xf32>
    %121 = vector.multi_reduction <add>, %120, %cst_34 [1] : vector<32x128xf32> to vector<32xf32>
    %122 = vector.shape_cast %121 : vector<32xf32> to vector<32x1xf32>
    %cst_35 = arith.constant 3.125000e-02 : f32
    %123 = vector.broadcast %cst_35 : f32 to vector<32x1xf32>
    %124 = arith.mulf %122, %123 : vector<32x1xf32>
    %125 = vector.broadcast %124 : vector<32x1xf32> to vector<32x128xf32>
    %126 = arith.subf %115, %125 : vector<32x128xf32>
    %127 = arith.mulf %126, %20 : vector<32x128xf32>
    %128 = arith.mulf %127, %127 : vector<32x128xf32>
    %cst_36 = arith.constant dense<0.000000e+00> : vector<32xf32>
    %129 = vector.multi_reduction <add>, %128, %cst_36 [1] : vector<32x128xf32> to vector<32xf32>
    %130 = vector.shape_cast %129 : vector<32xf32> to vector<32x1xf32>
    %cst_37 = arith.constant 3.125000e-02 : f32
    %131 = vector.broadcast %cst_37 : f32 to vector<32x1xf32>
    %132 = arith.mulf %130, %131 : vector<32x1xf32>
    %cst_38 = arith.constant 9.99999974E-6 : f32
    %133 = vector.broadcast %cst_38 : f32 to vector<32x1xf32>
    %134 = arith.addf %132, %133 : vector<32x1xf32>
    %135 = math.rsqrt %134 : vector<32x1xf32>
    %136 = arith.mulf %135, %117 : vector<32x1xf32>
    %137 = vector.broadcast %136 : vector<32x1xf32> to vector<32x128xf32>
    %138 = arith.mulf %115, %137 : vector<32x128xf32>
    %139 = arith.mulf %124, %136 : vector<32x1xf32>
    %140 = arith.subf %119, %139 : vector<32x1xf32>
    %141 = vector.broadcast %140 : vector<32x1xf32> to vector<32x128xf32>
    %142 = arith.addf %138, %141 : vector<32x128xf32>
    %c1 = arith.constant 1 : index
    %c0_39 = arith.constant 0 : index
    %c0_40 = arith.constant 0 : index
    %143 = vector.load %arg2[%c1, %c0_39, %c0_40] : memref<4x32x160xbf16, #tpu.memory_space<vmem>>, vector<1x32x160xbf16>
    %144 = vector.shape_cast %143 : vector<1x32x160xbf16> to vector<32x160xbf16>
    %c2_i32_41 = arith.constant 2 : i32
    %145 = tpu.dynamic_rotate %142 by %c2_i32_41 dim 1 : vector<32x128xf32>, i32 -> vector<32x128xf32>
    %146 = arith.mulf %145, %31 : vector<32x128xf32>
    %c1_i32_42 = arith.constant 1 : i32
    %147 = tpu.dynamic_rotate %142 by %c1_i32_42 dim 1 : vector<32x128xf32>, i32 -> vector<32x128xf32>
    %148 = arith.mulf %147, %42 : vector<32x128xf32>
    %c127_i32_43 = arith.constant 127 : i32
    %149 = tpu.dynamic_rotate %142 by %c127_i32_43 dim 1 : vector<32x128xf32>, i32 -> vector<32x128xf32>
    %150 = arith.mulf %149, %53 : vector<32x128xf32>
    %c126_i32_44 = arith.constant 126 : i32
    %151 = tpu.dynamic_rotate %142 by %c126_i32_44 dim 1 : vector<32x128xf32>, i32 -> vector<32x128xf32>
    %152 = arith.mulf %151, %64 : vector<32x128xf32>
    %153 = tpu.concatenate %146, %148, %142, %150, %152 in 0 : vector<32x128xf32>, vector<32x128xf32>, vector<32x128xf32>, vector<32x128xf32>, vector<32x128xf32> -> vector<160x128xf32>
    %154 = arith.truncf %153 : vector<160x128xf32> to vector<160x128xbf16>
    %cst_45 = arith.constant dense<0.000000e+00> : vector<32x128xf32>
    %155 = tpu.matmul %144, %154, %cst_45 {dimension_numbers = #tpu.dot_dimension_numbers<[1], [0], [0], [1], [0, 0, 1, 1], [], []>} : vector<32x160xbf16>, vector<160x128xbf16>, vector<32x128xf32> -> vector<32x128xf32>
    %156 = vector.extract_strided_slice %65 {offsets = [5, 0, 0], sizes = [1, 32, 1], strides = [1, 1, 1]} : vector<12x32x1xf32> to vector<1x32x1xf32>
    %157 = vector.shape_cast %156 : vector<1x32x1xf32> to vector<32x1xf32>
    %158 = vector.extract_strided_slice %65 {offsets = [6, 0, 0], sizes = [1, 32, 1], strides = [1, 1, 1]} : vector<12x32x1xf32> to vector<1x32x1xf32>
    %159 = vector.shape_cast %158 : vector<1x32x1xf32> to vector<32x1xf32>
    %160 = arith.mulf %155, %20 : vector<32x128xf32>
    %cst_46 = arith.constant dense<0.000000e+00> : vector<32xf32>
    %161 = vector.multi_reduction <add>, %160, %cst_46 [1] : vector<32x128xf32> to vector<32xf32>
    %162 = vector.shape_cast %161 : vector<32xf32> to vector<32x1xf32>
    %cst_47 = arith.constant 3.125000e-02 : f32
    %163 = vector.broadcast %cst_47 : f32 to vector<32x1xf32>
    %164 = arith.mulf %162, %163 : vector<32x1xf32>
    %165 = vector.broadcast %164 : vector<32x1xf32> to vector<32x128xf32>
    %166 = arith.subf %155, %165 : vector<32x128xf32>
    %167 = arith.mulf %166, %20 : vector<32x128xf32>
    %168 = arith.mulf %167, %167 : vector<32x128xf32>
    %cst_48 = arith.constant dense<0.000000e+00> : vector<32xf32>
    %169 = vector.multi_reduction <add>, %168, %cst_48 [1] : vector<32x128xf32> to vector<32xf32>
    %170 = vector.shape_cast %169 : vector<32xf32> to vector<32x1xf32>
    %cst_49 = arith.constant 3.125000e-02 : f32
    %171 = vector.broadcast %cst_49 : f32 to vector<32x1xf32>
    %172 = arith.mulf %170, %171 : vector<32x1xf32>
    %cst_50 = arith.constant 9.99999974E-6 : f32
    %173 = vector.broadcast %cst_50 : f32 to vector<32x1xf32>
    %174 = arith.addf %172, %173 : vector<32x1xf32>
    %175 = math.rsqrt %174 : vector<32x1xf32>
    %176 = arith.mulf %175, %157 : vector<32x1xf32>
    %177 = vector.broadcast %176 : vector<32x1xf32> to vector<32x128xf32>
    %178 = arith.mulf %155, %177 : vector<32x128xf32>
    %179 = arith.mulf %164, %176 : vector<32x1xf32>
    %180 = arith.subf %159, %179 : vector<32x1xf32>
    %181 = vector.broadcast %180 : vector<32x1xf32> to vector<32x128xf32>
    %182 = arith.addf %178, %181 : vector<32x128xf32>
    %183 = arith.addf %182, %96 : vector<32x128xf32>
    %c2 = arith.constant 2 : index
    %c0_51 = arith.constant 0 : index
    %c0_52 = arith.constant 0 : index
    %184 = vector.load %arg2[%c2, %c0_51, %c0_52] : memref<4x32x160xbf16, #tpu.memory_space<vmem>>, vector<1x32x160xbf16>
    %185 = vector.shape_cast %184 : vector<1x32x160xbf16> to vector<32x160xbf16>
    %c2_i32_53 = arith.constant 2 : i32
    %186 = tpu.dynamic_rotate %183 by %c2_i32_53 dim 1 : vector<32x128xf32>, i32 -> vector<32x128xf32>
    %187 = arith.mulf %186, %31 : vector<32x128xf32>
    %c1_i32_54 = arith.constant 1 : i32
    %188 = tpu.dynamic_rotate %183 by %c1_i32_54 dim 1 : vector<32x128xf32>, i32 -> vector<32x128xf32>
    %189 = arith.mulf %188, %42 : vector<32x128xf32>
    %c127_i32_55 = arith.constant 127 : i32
    %190 = tpu.dynamic_rotate %183 by %c127_i32_55 dim 1 : vector<32x128xf32>, i32 -> vector<32x128xf32>
    %191 = arith.mulf %190, %53 : vector<32x128xf32>
    %c126_i32_56 = arith.constant 126 : i32
    %192 = tpu.dynamic_rotate %183 by %c126_i32_56 dim 1 : vector<32x128xf32>, i32 -> vector<32x128xf32>
    %193 = arith.mulf %192, %64 : vector<32x128xf32>
    %194 = tpu.concatenate %187, %189, %183, %191, %193 in 0 : vector<32x128xf32>, vector<32x128xf32>, vector<32x128xf32>, vector<32x128xf32>, vector<32x128xf32> -> vector<160x128xf32>
    %195 = arith.truncf %194 : vector<160x128xf32> to vector<160x128xbf16>
    %cst_57 = arith.constant dense<0.000000e+00> : vector<32x128xf32>
    %196 = tpu.matmul %185, %195, %cst_57 {dimension_numbers = #tpu.dot_dimension_numbers<[1], [0], [0], [1], [0, 0, 1, 1], [], []>} : vector<32x160xbf16>, vector<160x128xbf16>, vector<32x128xf32> -> vector<32x128xf32>
    %197 = vector.extract_strided_slice %65 {offsets = [7, 0, 0], sizes = [1, 32, 1], strides = [1, 1, 1]} : vector<12x32x1xf32> to vector<1x32x1xf32>
    %198 = vector.shape_cast %197 : vector<1x32x1xf32> to vector<32x1xf32>
    %199 = vector.broadcast %198 : vector<32x1xf32> to vector<32x128xf32>
    %200 = arith.addf %196, %199 : vector<32x128xf32>
    %cst_58 = arith.constant 0.000000e+00 : f32
    %201 = vector.broadcast %cst_58 : f32 to vector<32x128xf32>
    %202 = arith.maximumf %200, %201 : vector<32x128xf32>
    %203 = vector.extract_strided_slice %65 {offsets = [8, 0, 0], sizes = [1, 32, 1], strides = [1, 1, 1]} : vector<12x32x1xf32> to vector<1x32x1xf32>
    %204 = vector.shape_cast %203 : vector<1x32x1xf32> to vector<32x1xf32>
    %205 = vector.extract_strided_slice %65 {offsets = [9, 0, 0], sizes = [1, 32, 1], strides = [1, 1, 1]} : vector<12x32x1xf32> to vector<1x32x1xf32>
    %206 = vector.shape_cast %205 : vector<1x32x1xf32> to vector<32x1xf32>
    %207 = arith.mulf %202, %20 : vector<32x128xf32>
    %cst_59 = arith.constant dense<0.000000e+00> : vector<32xf32>
    %208 = vector.multi_reduction <add>, %207, %cst_59 [1] : vector<32x128xf32> to vector<32xf32>
    %209 = vector.shape_cast %208 : vector<32xf32> to vector<32x1xf32>
    %cst_60 = arith.constant 3.125000e-02 : f32
    %210 = vector.broadcast %cst_60 : f32 to vector<32x1xf32>
    %211 = arith.mulf %209, %210 : vector<32x1xf32>
    %212 = vector.broadcast %211 : vector<32x1xf32> to vector<32x128xf32>
    %213 = arith.subf %202, %212 : vector<32x128xf32>
    %214 = arith.mulf %213, %20 : vector<32x128xf32>
    %215 = arith.mulf %214, %214 : vector<32x128xf32>
    %cst_61 = arith.constant dense<0.000000e+00> : vector<32xf32>
    %216 = vector.multi_reduction <add>, %215, %cst_61 [1] : vector<32x128xf32> to vector<32xf32>
    %217 = vector.shape_cast %216 : vector<32xf32> to vector<32x1xf32>
    %cst_62 = arith.constant 3.125000e-02 : f32
    %218 = vector.broadcast %cst_62 : f32 to vector<32x1xf32>
    %219 = arith.mulf %217, %218 : vector<32x1xf32>
    %cst_63 = arith.constant 9.99999974E-6 : f32
    %220 = vector.broadcast %cst_63 : f32 to vector<32x1xf32>
    %221 = arith.addf %219, %220 : vector<32x1xf32>
    %222 = math.rsqrt %221 : vector<32x1xf32>
    %223 = arith.mulf %222, %204 : vector<32x1xf32>
    %224 = vector.broadcast %223 : vector<32x1xf32> to vector<32x128xf32>
    %225 = arith.mulf %202, %224 : vector<32x128xf32>
    %226 = arith.mulf %211, %223 : vector<32x1xf32>
    %227 = arith.subf %206, %226 : vector<32x1xf32>
    %228 = vector.broadcast %227 : vector<32x1xf32> to vector<32x128xf32>
    %229 = arith.addf %225, %228 : vector<32x128xf32>
    %c3 = arith.constant 3 : index
    %c0_64 = arith.constant 0 : index
    %c0_65 = arith.constant 0 : index
    %230 = vector.load %arg2[%c3, %c0_64, %c0_65] : memref<4x32x160xbf16, #tpu.memory_space<vmem>>, vector<1x32x160xbf16>
    %231 = vector.shape_cast %230 : vector<1x32x160xbf16> to vector<32x160xbf16>
    %c2_i32_66 = arith.constant 2 : i32
    %232 = tpu.dynamic_rotate %229 by %c2_i32_66 dim 1 : vector<32x128xf32>, i32 -> vector<32x128xf32>
    %233 = arith.mulf %232, %31 : vector<32x128xf32>
    %c1_i32_67 = arith.constant 1 : i32
    %234 = tpu.dynamic_rotate %229 by %c1_i32_67 dim 1 : vector<32x128xf32>, i32 -> vector<32x128xf32>
    %235 = arith.mulf %234, %42 : vector<32x128xf32>
    %c127_i32_68 = arith.constant 127 : i32
    %236 = tpu.dynamic_rotate %229 by %c127_i32_68 dim 1 : vector<32x128xf32>, i32 -> vector<32x128xf32>
    %237 = arith.mulf %236, %53 : vector<32x128xf32>
    %c126_i32_69 = arith.constant 126 : i32
    %238 = tpu.dynamic_rotate %229 by %c126_i32_69 dim 1 : vector<32x128xf32>, i32 -> vector<32x128xf32>
    %239 = arith.mulf %238, %64 : vector<32x128xf32>
    %240 = tpu.concatenate %233, %235, %229, %237, %239 in 0 : vector<32x128xf32>, vector<32x128xf32>, vector<32x128xf32>, vector<32x128xf32>, vector<32x128xf32> -> vector<160x128xf32>
    %241 = arith.truncf %240 : vector<160x128xf32> to vector<160x128xbf16>
    %cst_70 = arith.constant dense<0.000000e+00> : vector<32x128xf32>
    %242 = tpu.matmul %231, %241, %cst_70 {dimension_numbers = #tpu.dot_dimension_numbers<[1], [0], [0], [1], [0, 0, 1, 1], [], []>} : vector<32x160xbf16>, vector<160x128xbf16>, vector<32x128xf32> -> vector<32x128xf32>
    %243 = vector.extract_strided_slice %65 {offsets = [10, 0, 0], sizes = [1, 32, 1], strides = [1, 1, 1]} : vector<12x32x1xf32> to vector<1x32x1xf32>
    %244 = vector.shape_cast %243 : vector<1x32x1xf32> to vector<32x1xf32>
    %245 = vector.extract_strided_slice %65 {offsets = [11, 0, 0], sizes = [1, 32, 1], strides = [1, 1, 1]} : vector<12x32x1xf32> to vector<1x32x1xf32>
    %246 = vector.shape_cast %245 : vector<1x32x1xf32> to vector<32x1xf32>
    %247 = arith.mulf %242, %20 : vector<32x128xf32>
    %cst_71 = arith.constant dense<0.000000e+00> : vector<32xf32>
    %248 = vector.multi_reduction <add>, %247, %cst_71 [1] : vector<32x128xf32> to vector<32xf32>
    %249 = vector.shape_cast %248 : vector<32xf32> to vector<32x1xf32>
    %cst_72 = arith.constant 3.125000e-02 : f32
    %250 = vector.broadcast %cst_72 : f32 to vector<32x1xf32>
    %251 = arith.mulf %249, %250 : vector<32x1xf32>
    %252 = vector.broadcast %251 : vector<32x1xf32> to vector<32x128xf32>
    %253 = arith.subf %242, %252 : vector<32x128xf32>
    %254 = arith.mulf %253, %20 : vector<32x128xf32>
    %255 = arith.mulf %254, %254 : vector<32x128xf32>
    %cst_73 = arith.constant dense<0.000000e+00> : vector<32xf32>
    %256 = vector.multi_reduction <add>, %255, %cst_73 [1] : vector<32x128xf32> to vector<32xf32>
    %257 = vector.shape_cast %256 : vector<32xf32> to vector<32x1xf32>
    %cst_74 = arith.constant 3.125000e-02 : f32
    %258 = vector.broadcast %cst_74 : f32 to vector<32x1xf32>
    %259 = arith.mulf %257, %258 : vector<32x1xf32>
    %cst_75 = arith.constant 9.99999974E-6 : f32
    %260 = vector.broadcast %cst_75 : f32 to vector<32x1xf32>
    %261 = arith.addf %259, %260 : vector<32x1xf32>
    %262 = math.rsqrt %261 : vector<32x1xf32>
    %263 = arith.mulf %262, %244 : vector<32x1xf32>
    %264 = vector.broadcast %263 : vector<32x1xf32> to vector<32x128xf32>
    %265 = arith.mulf %242, %264 : vector<32x128xf32>
    %266 = arith.mulf %251, %263 : vector<32x1xf32>
    %267 = arith.subf %246, %266 : vector<32x1xf32>
    %268 = vector.broadcast %267 : vector<32x1xf32> to vector<32x128xf32>
    %269 = arith.addf %265, %268 : vector<32x128xf32>
    %270 = arith.addf %269, %183 : vector<32x128xf32>
    %c127_i32_76 = arith.constant 127 : i32
    %271 = tpu.dynamic_rotate %270 by %c127_i32_76 dim 1 : vector<32x128xf32>, i32 -> vector<32x128xf32>
    %272 = arith.maximumf %270, %271 : vector<32x128xf32>
    %c0_77 = arith.constant 0 : index
    %c0_78 = arith.constant 0 : index
    %273 = vector.load %arg4[%c0_77, %c0_78] : memref<32x128xf32, #tpu.memory_space<vmem>>, vector<32x128xf32>
    tpu.vector_store %arg4[%c0_77, %c0_78], %272 {strides = array<i32>} : memref<32x128xf32, #tpu.memory_space<vmem>>, vector<32x128xf32>,
    return
  }
}

</mosaic_0001>

<llo_original>
// kernel: tpu_custom_call.1
$region0: #{tpu_custom_call.1}
  #allocation0 [shape = 'u32[]', space=smem, size = 0x4, offset = 0x4, fixed_abs, tag = 'smem constant byte address 0x4 - core index']
  #allocation1 [shape = 'u32[72,128]{1,0:T(1,128)}', space=vmem, size = 0x9000, scoped, tag = 'internal scratch']
  %s0 = inlined_call_operand.vmem [shape: f32[8,128], index: 0, kind: input, shape index: {}]
  %s1 = inlined_call_operand.vmem [shape: bf16[32,8], index: 1, kind: input, shape index: {}]
  %s2 = inlined_call_operand.vmem [shape: bf16[4,32,160], index: 2, kind: input, shape index: {}]
  %s3 = inlined_call_operand.vmem [shape: f32[12,32,1], index: 3, kind: input, shape index: {}]
  %s4 = inlined_call_operand.hbm [shape: f32[32,128], index: 4, kind: output, shape index: {}]
  %s5 = sld [smem:[#allocation0]]
  $region26: #{tpu_custom_call.1} parent=0
    _
  %s7 = ssub.s32 1, %s5
  %s8 = scalar_select 0, %s7, %s5
  $region1: #{tpu_custom_call.1} parent=0
    #allocation2 [shape = 'u8[16384]{0}', space=vmem, size = 0x4000, scoped, tag = 'output window, operand 0, single buffered']
    #allocation3 [shape = 's32[1]{0}', space=sflag, size = 0x4, scoped, tag = 'scoped memory for tpu_custom_call.1']
    %9 = vsyncpa [#allocation3], 0
    // Predicated region
    $region2: #{tpu_custom_call.1} parent=1 // pred_check
      _
    $region3: #{tpu_custom_call.1} parent=1 // pred_check_branch
      %11 = sbr.rel (0) target = $region5
    $region4: #{tpu_custom_call.1} parent=1 // pred_region
      _
    $region5: #{tpu_custom_call.1} parent=1 // pred_fallthru
      _
    // Predicated region
    $region6: #{tpu_custom_call.1} parent=1 // pred_check
      _
    $region7: #{tpu_custom_call.1} parent=1 // pred_check_branch
      %13 = sbr.rel (0) target = $region9
    $region8: #{tpu_custom_call.1} parent=1 // pred_region
      _
    $region9: #{tpu_custom_call.1} parent=1 // pred_fallthru
      _
    // Predicated region
    $region10: #{tpu_custom_call.1} parent=1 // pred_check
      _
    $region11: #{tpu_custom_call.1} parent=1 // pred_check_branch
      %15 = sbr.rel (0) target = $region13
    $region12: #{tpu_custom_call.1} parent=1 // pred_region
      _
    $region13: #{tpu_custom_call.1} parent=1 // pred_fallthru
      _
    // Predicated region
    $region14: #{tpu_custom_call.1} parent=1 // pred_check
      _
    $region15: #{tpu_custom_call.1} parent=1 // pred_check_branch
      %17 = sbr.rel (0) target = $region17
    $region16: #{tpu_custom_call.1} parent=1 // pred_region
      _
    $region17: #{tpu_custom_call.1} parent=1 // pred_fallthru
      _
    %v19 = vlaneseq
    %v20 = vand.u32 %v19, 127
    %vm21 = vcmp.lt.s32.totalorder %v20, 0
    %v22 = vsub.s32 0, %v20
    %v23 = vsel %vm21, %v22, %v20
    %v24 = vshrl.u32 %v23, 4
    %v25 = vand.u32 %v23, 15
    %v26 = vsub.s32 0, %v25
    %v27 = vsel %vm21, %v26, %v25
    %vm28 = vcmp.ne.s32.totalorder %v27, 0
    %vm29 = vcmp.lt.s32.totalorder %v27, 0
    %vm30 = vmand %vm29, %vm28
    %v31 = vadd.s32 %v27, 16
    %v32 = vsel %vm30, %v31, %v27
    %vm33 = vcmp.lt.s32.totalorder %v20, 32
    %v34 = vsel %vm33, 1, 0
    %v35 = vcvt.s32.f32 %v34
    %v36 = vadd.s32 %v32, 4294967294
    %vm37 = vcmp.ge.s32.totalorder %v36, 0
    %vm38 = vcmp.lt.s32.totalorder %v36, 16
    %vm39 = vmand %vm37, %vm38
    %v40 = vsel %vm39, 1, 0
    %v41 = vcvt.s32.f32 %v40
    %v42 = vadd.s32 %v32, 4294967295
    %vm43 = vcmp.ge.s32.totalorder %v42, 0
    %vm44 = vcmp.lt.s32.totalorder %v42, 16
    %vm45 = vmand %vm43, %vm44
    %v46 = vsel %vm45, 1, 0
    %v47 = vcvt.s32.f32 %v46
    %v48 = vadd.s32 %v32, 1
    %vm49 = vcmp.ge.s32.totalorder %v48, 0
    %vm50 = vcmp.lt.s32.totalorder %v48, 16
    %vm51 = vmand %vm49, %vm50
    %v52 = vsel %vm51, 1, 0
    %v53 = vcvt.s32.f32 %v52
    %v54 = vadd.s32 %v32, 2
    %vm55 = vcmp.ge.s32.totalorder %v54, 0
    %vm56 = vcmp.lt.s32.totalorder %v54, 16
    %vm57 = vmand %vm55, %vm56
    %v58 = vsel %vm57, 1, 0
    %v59 = vcvt.s32.f32 %v58
    %v60 = vld [vmem:[%s3] sm:$0xff]
    %v61 = vld [vmem:[%s3 + $0x8] sm:$0xff]
    %v62 = vld [vmem:[%s3 + $0x10] sm:$0xff]
    %v63 = vld [vmem:[%s3 + $0x18] sm:$0xff]
    %v64 = vld [vmem:[%s3 + $0x20] sm:$0xff]
    %v65 = vld [vmem:[%s3 + $0x28] sm:$0xff]
    %v66 = vld [vmem:[%s3 + $0x30] sm:$0xff]
    %v67 = vld [vmem:[%s3 + $0x38] sm:$0xff]
    %v68 = vld [vmem:[%s3 + $0x40] sm:$0xff]
    %v69 = vld [vmem:[%s3 + $0x48] sm:$0xff]
    %v70 = vld [vmem:[%s3 + $0x50] sm:$0xff]
    %v71 = vld [vmem:[%s3 + $0x58] sm:$0xff]
    %v72 = vld [vmem:[%s3 + $0x60] sm:$0xff]
    %v73 = vld [vmem:[%s3 + $0x68] sm:$0xff]
    %v74 = vld [vmem:[%s3 + $0x70] sm:$0xff]
    %v75 = vld [vmem:[%s3 + $0x78] sm:$0xff]
    %v76 = vld [vmem:[%s3 + $0x80] sm:$0xff]
    %v77 = vld [vmem:[%s3 + $0x88] sm:$0xff]
    %v78 = vld [vmem:[%s3 + $0x90] sm:$0xff]
    %v79 = vld [vmem:[%s3 + $0x98] sm:$0xff]
    %v80 = vld [vmem:[%s3 + $0xa0] sm:$0xff]
    %v81 = vld [vmem:[%s3 + $0xa8] sm:$0xff]
    %v82 = vld [vmem:[%s3 + $0xb0] sm:$0xff]
    %v83 = vld [vmem:[%s3 + $0xb8] sm:$0xff]
    %v84 = vld [vmem:[%s3 + $0xc0] sm:$0xff]
    %v85 = vld [vmem:[%s3 + $0xc8] sm:$0xff]
    %v86 = vld [vmem:[%s3 + $0xd0] sm:$0xff]
    %v87 = vld [vmem:[%s3 + $0xd8] sm:$0xff]
    %v88 = vld [vmem:[%s3 + $0xe0] sm:$0xff]
    %v89 = vld [vmem:[%s3 + $0xe8] sm:$0xff]
    %v90 = vld [vmem:[%s3 + $0xf0] sm:$0xff]
    %v91 = vld [vmem:[%s3 + $0xf8] sm:$0xff]
    %v92 = vld [vmem:[%s3 + $0x100] sm:$0xff]
    %v93 = vld [vmem:[%s3 + $0x108] sm:$0xff]
    %v94 = vld [vmem:[%s3 + $0x110] sm:$0xff]
    %v95 = vld [vmem:[%s3 + $0x118] sm:$0xff]
    %v96 = vld [vmem:[%s3 + $0x120] sm:$0xff]
    %v97 = vld [vmem:[%s3 + $0x128] sm:$0xff]
    %v98 = vld [vmem:[%s3 + $0x130] sm:$0xff]
    %v99 = vld [vmem:[%s3 + $0x138] sm:$0xff]
    %v100 = vld [vmem:[%s3 + $0x140] sm:$0xff]
    %v101 = vld [vmem:[%s3 + $0x148] sm:$0xff]
    %v102 = vld [vmem:[%s3 + $0x150] sm:$0xff]
    %v103 = vld [vmem:[%s3 + $0x158] sm:$0xff]
    %v104 = vld [vmem:[%s3 + $0x160] sm:$0xff]
    %v105 = vld [vmem:[%s3 + $0x168] sm:$0xff]
    %v106 = vld [vmem:[%s3 + $0x170] sm:$0xff]
    %v107 = vld [vmem:[%s3 + $0x178] sm:$0xff]
    %v108 = vld [vmem:[%s0] sm:$0xff]
    %v109 = vld [vmem:[%s1] sm:$0xf]
    %v110 = vld [vmem:[%s1 + $0x4] sm:$0xf]
    %v111 = vld [vmem:[%s1 + $0x8] sm:$0xf]
    %v112 = vld [vmem:[%s1 + $0xc] sm:$0xf]
    %v113 = vpack.c.bf16 %v108, %v108
    %v118 = vunpack.c.l.b16 %v109
    %v119 = vunpack.c.l.b16 %v110
    %v120 = vunpack.c.l.b16 %v111
    %v121 = vunpack.c.l.b16 %v112
    %v122 = vpack.c.b16 %v119, %v118
    %v123 = vpack.c.b16 %v121, %v120
    %vm124 = vcmask 64512
    %v126 = vsel %vm124, %v122, 0
    %v129 = vsel %vm124, %v123, 0
    %vm131 = vcmask 1043456
    %v133 = vsel %vm131, %v113, 0
    %135 = vmatpush.bf16.msra.mxu0 0
    %136 = vmatpush.bf16.msra.mxu0 0
    %137 = vmatpush.bf16.msra.mxu0 0
    %138 = vmatpush.bf16.msra.mxu0 0
    %139 = vmatpush.bf16.msra.mxu0 0
    %140 = vmatpush.bf16.msra.mxu0 0
    %141 = vmatpush.bf16.msra.mxu0 0
    %142 = vmatpush.bf16.msra.mxu0 %v133
    %143 = vmatmul.bf16.gmra.mxu0 %v126
    %v144 = vpop.f32.mrf.mxu0
    %v145 = vadd.f32 0.0, %v144
    %v146 = vpop.f32.mrf.mxu0
    %v147 = vadd.f32 0.0, %v146
    %148 = vmatmul.bf16.gmra.mxu0 %v129
    %v149 = vpop.f32.mrf.mxu0
    %v150 = vadd.f32 0.0, %v149
    %v151 = vpop.f32.mrf.mxu0
    %v152 = vadd.f32 0.0, %v151
    %153 = vdwg.mxu0
    %v154 = vmul.f32 %v145, %v35
    %v155 = vmul.f32 %v147, %v35
    %v156 = vmul.f32 %v150, %v35
    %v157 = vmul.f32 %v152, %v35
    %158 = vadd.xlane.f32.xlu0 %v154
    %v159 = vpop.xlane.xlu0 %158
    %160 = vadd.xlane.f32.xlu0 %v155
    %v161 = vpop.xlane.xlu0 %160
    %162 = vadd.xlane.f32.xlu0 %v156
    %v163 = vpop.xlane.xlu0 %162
    %164 = vadd.xlane.f32.xlu0 %v157
    %v165 = vpop.xlane.xlu0 %164
    %v166 = vmul.f32 %v159, 0.03125
    %v167 = vmul.f32 %v161, 0.03125
    %v168 = vmul.f32 %v163, 0.03125
    %v169 = vmul.f32 %v165, 0.03125
    %v170 = vsub.f32 %v145, %v166
    %v171 = vsub.f32 %v147, %v167
    %v172 = vsub.f32 %v150, %v168
    %v173 = vsub.f32 %v152, %v169
    %v174 = vmul.f32 %v170, %v35
    %v175 = vmul.f32 %v171, %v35
    %v176 = vmul.f32 %v172, %v35
    %v177 = vmul.f32 %v173, %v35
    %v178 = vmul.f32 %v174, %v174
    %v179 = vmul.f32 %v175, %v175
    %v180 = vmul.f32 %v176, %v176
    %v181 = vmul.f32 %v177, %v177
    %182 = vadd.xlane.f32.xlu0 %v178
    %v183 = vpop.xlane.xlu0 %182
    %184 = vadd.xlane.f32.xlu0 %v179
    %v185 = vpop.xlane.xlu0 %184
    %186 = vadd.xlane.f32.xlu0 %v180
    %v187 = vpop.xlane.xlu0 %186
    %188 = vadd.xlane.f32.xlu0 %v181
    %v189 = vpop.xlane.xlu0 %188
    %v190 = vmul.f32 %v183, 0.03125
    %v191 = vmul.f32 %v185, 0.03125
    %v192 = vmul.f32 %v187, 0.03125
    %v193 = vmul.f32 %v189, 0.03125
    %v194 = vadd.f32 %v190, 1e-05
    %v195 = vadd.f32 %v191, 1e-05
    %v196 = vadd.f32 %v192, 1e-05
    %v197 = vadd.f32 %v193, 1e-05
    %v198 = vrsqrt.pop %v194
    %v199 = vmul.f32 %v198, %v194
    %v200 = vmul.f32 %v199, %v198
    %v201 = vmul.f32 0.5, %v200
    %v202 = vsub.f32 1.5, %v201
    %v203 = vmul.f32 %v198, %v202
    %vm204 = vweird.f32 %v194
    %vm205 = vweird.f32 %v198
    %vm206 = vmor %vm204, %vm205
    %v207 = vsel %vm206, %v198, %v203
    %v208 = vrsqrt.pop %v195
    %v209 = vmul.f32 %v208, %v195
    %v210 = vmul.f32 %v209, %v208
    %v211 = vmul.f32 0.5, %v210
    %v212 = vsub.f32 1.5, %v211
    %v213 = vmul.f32 %v208, %v212
    %vm214 = vweird.f32 %v195
    %vm215 = vweird.f32 %v208
    %vm216 = vmor %vm214, %vm215
    %v217 = vsel %vm216, %v208, %v213
    %v218 = vrsqrt.pop %v196
    %v219 = vmul.f32 %v218, %v196
    %v220 = vmul.f32 %v219, %v218
    %v221 = vmul.f32 0.5, %v220
    %v222 = vsub.f32 1.5, %v221
    %v223 = vmul.f32 %v218, %v222
    %vm224 = vweird.f32 %v196
    %vm225 = vweird.f32 %v218
    %vm226 = vmor %vm224, %vm225
    %v227 = vsel %vm226, %v218, %v223
    %v228 = vrsqrt.pop %v197
    %v229 = vmul.f32 %v228, %v197
    %v230 = vmul.f32 %v229, %v228
    %v231 = vmul.f32 0.5, %v230
    %v232 = vsub.f32 1.5, %v231
    %v233 = vmul.f32 %v228, %v232
    %vm234 = vweird.f32 %v197
    %vm235 = vweird.f32 %v228
    %vm236 = vmor %vm234, %vm235
    %v237 = vsel %vm236, %v228, %v233
    %v238 = vmul.f32 %v207, %v60
    %v239 = vmul.f32 %v217, %v61
    %v240 = vmul.f32 %v227, %v62
    %v241 = vmul.f32 %v237, %v63
    %243 = vset.pattern.permute.xlu0 0
    %244 = vperm.xlu0 %243, %v238
    %v245 = vpop.permute.xlu0 %244
    %248 = vset.pattern.permute.xlu0 0
    %249 = vperm.xlu0 %248, %v239
    %v250 = vpop.permute.xlu0 %249
    %253 = vset.pattern.permute.xlu0 0
    %254 = vperm.xlu0 %253, %v240
    %v255 = vpop.permute.xlu0 %254
    %258 = vset.pattern.permute.xlu0 0
    %259 = vperm.xlu0 %258, %v241
    %v260 = vpop.permute.xlu0 %259
    %v262 = vmul.f32 %v145, %v245
    %v263 = vmul.f32 %v147, %v250
    %v264 = vmul.f32 %v150, %v255
    %v265 = vmul.f32 %v152, %v260
    %v266 = vmul.f32 %v166, %v238
    %v267 = vmul.f32 %v167, %v239
    %v268 = vmul.f32 %v168, %v240
    %v269 = vmul.f32 %v169, %v241
    %v270 = vsub.f32 %v64, %v266
    %v271 = vsub.f32 %v65, %v267
    %v272 = vsub.f32 %v66, %v268
    %v273 = vsub.f32 %v67, %v269
    %275 = vset.pattern.permute.xlu0 0
    %276 = vperm.xlu0 %275, %v270
    %v277 = vpop.permute.xlu0 %276
    %280 = vset.pattern.permute.xlu0 0
    %281 = vperm.xlu0 %280, %v271
    %v282 = vpop.permute.xlu0 %281
    %285 = vset.pattern.permute.xlu0 0
    %286 = vperm.xlu0 %285, %v272
    %v287 = vpop.permute.xlu0 %286
    %290 = vset.pattern.permute.xlu0 0
    %291 = vperm.xlu0 %290, %v273
    %v292 = vpop.permute.xlu0 %291
    %v294 = vadd.f32 %v262, %v277
    %v295 = vadd.f32 %v263, %v282
    %v296 = vadd.f32 %v264, %v287
    %v297 = vadd.f32 %v265, %v292
    %v298 = vld [vmem:[%s2] sm:$0xff]
    %v299 = vld [vmem:[%s2 + $0x8] sm:$0xff]
    %v300 = vld [vmem:[%s2 + $0x10] sm:$0xff]
    %v301 = vld [vmem:[%s2 + $0x18] sm:$0xff]
    %302 = vrot.lane.b32.xlu0 %v294, 2
    %v303 = vpop.permute.xlu0 %302
    %304 = vrot.lane.b32.xlu0 %v295, 2
    %v305 = vpop.permute.xlu0 %304
    %306 = vrot.lane.b32.xlu0 %v296, 2
    %v307 = vpop.permute.xlu0 %306
    %308 = vrot.lane.b32.xlu0 %v297, 2
    %v309 = vpop.permute.xlu0 %308
    %v310 = vmul.f32 %v303, %v41
    %v311 = vmul.f32 %v305, %v41
    %v312 = vmul.f32 %v307, %v41
    %v313 = vmul.f32 %v309, %v41
    %314 = vrot.lane.b32.xlu0 %v294, 1
    %v315 = vpop.permute.xlu0 %314
    %316 = vrot.lane.b32.xlu0 %v295, 1
    %v317 = vpop.permute.xlu0 %316
    %318 = vrot.lane.b32.xlu0 %v296, 1
    %v319 = vpop.permute.xlu0 %318
    %320 = vrot.lane.b32.xlu0 %v297, 1
    %v321 = vpop.permute.xlu0 %320
    %v322 = vmul.f32 %v315, %v47
    %v323 = vmul.f32 %v317, %v47
    %v324 = vmul.f32 %v319, %v47
    %v325 = vmul.f32 %v321, %v47
    %326 = vrot.lane.b32.xlu0 %v294, 127
    %v327 = vpop.permute.xlu0 %326
    %328 = vrot.lane.b32.xlu0 %v295, 127
    %v329 = vpop.permute.xlu0 %328
    %330 = vrot.lane.b32.xlu0 %v296, 127
    %v331 = vpop.permute.xlu0 %330
    %332 = vrot.lane.b32.xlu0 %v297, 127
    %v333 = vpop.permute.xlu0 %332
    %v334 = vmul.f32 %v327, %v53
    %v335 = vmul.f32 %v329, %v53
    %v336 = vmul.f32 %v331, %v53
    %v337 = vmul.f32 %v333, %v53
    %338 = vrot.lane.b32.xlu0 %v294, 126
    %v339 = vpop.permute.xlu0 %338
    %340 = vrot.lane.b32.xlu0 %v295, 126
    %v341 = vpop.permute.xlu0 %340
    %342 = vrot.lane.b32.xlu0 %v296, 126
    %v343 = vpop.permute.xlu0 %342
    %344 = vrot.lane.b32.xlu0 %v297, 126
    %v345 = vpop.permute.xlu0 %344
    %v346 = vmul.f32 %v339, %v59
    %v347 = vmul.f32 %v341, %v59
    %v348 = vmul.f32 %v343, %v59
    %v349 = vmul.f32 %v345, %v59
    %v350 = vpack.c.bf16 %v311, %v310
    %v351 = vpack.c.bf16 %v313, %v312
    %v352 = vpack.c.bf16 %v323, %v322
    %v353 = vpack.c.bf16 %v325, %v324
    %v354 = vpack.c.bf16 %v295, %v294
    %v355 = vpack.c.bf16 %v297, %v296
    %v356 = vpack.c.bf16 %v335, %v334
    %v357 = vpack.c.bf16 %v337, %v336
    %v358 = vpack.c.bf16 %v347, %v346
    %v359 = vpack.c.bf16 %v349, %v348
    %361 = vset.pattern.permute.xlu0 0
    %362 = vperm.xlu0 %361, %v68
    %v363 = vpop.permute.xlu0 %362
    %366 = vset.pattern.permute.xlu0 0
    %367 = vperm.xlu0 %366, %v69
    %v368 = vpop.permute.xlu0 %367
    %371 = vset.pattern.permute.xlu0 0
    %372 = vperm.xlu0 %371, %v70
    %v373 = vpop.permute.xlu0 %372
    %376 = vset.pattern.permute.xlu0 0
    %377 = vperm.xlu0 %376, %v71
    %v378 = vpop.permute.xlu0 %377
    %v384 = vunpack.c.l.b16 %v298
    %v385 = vunpack.c.h.b16 %v298
    %v386 = vunpack.c.l.b16 %v299
    %v387 = vunpack.c.h.b16 %v299
    %v388 = vunpack.c.l.b16 %v300
    %v389 = vunpack.c.h.b16 %v300
    %v390 = vunpack.c.l.b16 %v301
    %v391 = vunpack.c.h.b16 %v301
    %v392 = vpack.c.b16 %v386, %v384
    %v393 = vpack.c.b16 %v387, %v385
    %v394 = vpack.c.b16 %v390, %v388
    %v395 = vpack.c.b16 %v391, %v389
    %vm398 = vcmask 261120
    %v400 = vsel %vm398, %v393, 0
    %v403 = vsel %vm398, %v395, 0
    %405 = vmatpush.bf16.msra.mxu0 %v357
    %406 = vmatpush.bf16.msra.mxu0 %v356
    %407 = vmatpush.bf16.msra.mxu0 %v355
    %408 = vmatpush.bf16.msra.mxu0 %v354
    %409 = vmatpush.bf16.msra.mxu0 %v353
    %410 = vmatpush.bf16.msra.mxu0 %v352
    %411 = vmatpush.bf16.msra.mxu0 %v351
    %412 = vmatpush.bf16.msra.mxu0 %v350
    %413 = vmatmul.bf16.gmra.mxu0 %v392
    %v414 = vpop.f32.mrf.mxu0
    %v415 = vadd.f32 %v363, %v414
    %v416 = vpop.f32.mrf.mxu0
    %v417 = vadd.f32 %v368, %v416
    %418 = vmatmul.bf16.gmra.mxu0 %v394
    %v419 = vpop.f32.mrf.mxu0
    %v420 = vadd.f32 %v373, %v419
    %v421 = vpop.f32.mrf.mxu0
    %v422 = vadd.f32 %v378, %v421
    %423 = vdwg.mxu0
    %424 = vmatpush.bf16.msra.mxu0 0
    %425 = vmatpush.bf16.msra.mxu0 0
    %426 = vmatpush.bf16.msra.mxu0 0
    %427 = vmatpush.bf16.msra.mxu0 0
    %428 = vmatpush.bf16.msra.mxu0 0
    %429 = vmatpush.bf16.msra.mxu0 0
    %430 = vmatpush.bf16.msra.mxu0 %v359
    %431 = vmatpush.bf16.msra.mxu0 %v358
    %432 = vmatmul.bf16.gmra.mxu0 %v400
    %v433 = vpop.f32.mrf.mxu0
    %v434 = vadd.f32 %v415, %v433
    %v435 = vpop.f32.mrf.mxu0
    %v436 = vadd.f32 %v417, %v435
    %437 = vmatmul.bf16.gmra.mxu0 %v403
    %v438 = vpop.f32.mrf.mxu0
    %v439 = vadd.f32 %v420, %v438
    %v440 = vpop.f32.mrf.mxu0
    %v441 = vadd.f32 %v422, %v440
    %442 = vdwg.mxu0
    %v443 = vmax.f32 %v434, 0.0
    %v444 = vmax.f32 %v436, 0.0
    %v445 = vmax.f32 %v439, 0.0
    %v446 = vmax.f32 %v441, 0.0
    %v447 = vmul.f32 %v443, %v35
    %v448 = vmul.f32 %v444, %v35
    %v449 = vmul.f32 %v445, %v35
    %v450 = vmul.f32 %v446, %v35
    %451 = vadd.xlane.f32.xlu0 %v447
    %v452 = vpop.xlane.xlu0 %451
    %453 = vadd.xlane.f32.xlu0 %v448
    %v454 = vpop.xlane.xlu0 %453
    %455 = vadd.xlane.f32.xlu0 %v449
    %v456 = vpop.xlane.xlu0 %455
    %457 = vadd.xlane.f32.xlu0 %v450
    %v458 = vpop.xlane.xlu0 %457
    %v459 = vmul.f32 %v452, 0.03125
    %v460 = vmul.f32 %v454, 0.03125
    %v461 = vmul.f32 %v456, 0.03125
    %v462 = vmul.f32 %v458, 0.03125
    %v463 = vsub.f32 %v443, %v459
    %v464 = vsub.f32 %v444, %v460
    %v465 = vsub.f32 %v445, %v461
    %v466 = vsub.f32 %v446, %v462
    %v467 = vmul.f32 %v463, %v35
    %v468 = vmul.f32 %v464, %v35
    %v469 = vmul.f32 %v465, %v35
    %v470 = vmul.f32 %v466, %v35
    %v471 = vmul.f32 %v467, %v467
    %v472 = vmul.f32 %v468, %v468
    %v473 = vmul.f32 %v469, %v469
    %v474 = vmul.f32 %v470, %v470
    %475 = vadd.xlane.f32.xlu0 %v471
    %v476 = vpop.xlane.xlu0 %475
    %477 = vadd.xlane.f32.xlu0 %v472
    %v478 = vpop.xlane.xlu0 %477
    %479 = vadd.xlane.f32.xlu0 %v473
    %v480 = vpop.xlane.xlu0 %479
    %481 = vadd.xlane.f32.xlu0 %v474
    %v482 = vpop.xlane.xlu0 %481
    %v483 = vmul.f32 %v476, 0.03125
    %v484 = vmul.f32 %v478, 0.03125
    %v485 = vmul.f32 %v480, 0.03125
    %v486 = vmul.f32 %v482, 0.03125
    %v487 = vadd.f32 %v483, 1e-05
    %v488 = vadd.f32 %v484, 1e-05
    %v489 = vadd.f32 %v485, 1e-05
    %v490 = vadd.f32 %v486, 1e-05
    %v491 = vrsqrt.pop %v487
    %v492 = vmul.f32 %v491, %v487
    %v493 = vmul.f32 %v492, %v491
    %v494 = vmul.f32 0.5, %v493
    %v495 = vsub.f32 1.5, %v494
    %v496 = vmul.f32 %v491, %v495
    %vm497 = vweird.f32 %v487
    %vm498 = vweird.f32 %v491
    %vm499 = vmor %vm497, %vm498
    %v500 = vsel %vm499, %v491, %v496
    %v501 = vrsqrt.pop %v488
    %v502 = vmul.f32 %v501, %v488
    %v503 = vmul.f32 %v502, %v501
    %v504 = vmul.f32 0.5, %v503
    %v505 = vsub.f32 1.5, %v504
    %v506 = vmul.f32 %v501, %v505
    %vm507 = vweird.f32 %v488
    %vm508 = vweird.f32 %v501
    %vm509 = vmor %vm507, %vm508
    %v510 = vsel %vm509, %v501, %v506
    %v511 = vrsqrt.pop %v489
    %v512 = vmul.f32 %v511, %v489
    %v513 = vmul.f32 %v512, %v511
    %v514 = vmul.f32 0.5, %v513
    %v515 = vsub.f32 1.5, %v514
    %v516 = vmul.f32 %v511, %v515
    %vm517 = vweird.f32 %v489
    %vm518 = vweird.f32 %v511
    %vm519 = vmor %vm517, %vm518
    %v520 = vsel %vm519, %v511, %v516
    %v521 = vrsqrt.pop %v490
    %v522 = vmul.f32 %v521, %v490
    %v523 = vmul.f32 %v522, %v521
    %v524 = vmul.f32 0.5, %v523
    %v525 = vsub.f32 1.5, %v524
    %v526 = vmul.f32 %v521, %v525
    %vm527 = vweird.f32 %v490
    %vm528 = vweird.f32 %v521
    %vm529 = vmor %vm527, %vm528
    %v530 = vsel %vm529, %v521, %v526
    %v531 = vmul.f32 %v500, %v72
    %v532 = vmul.f32 %v510, %v73
    %v533 = vmul.f32 %v520, %v74
    %v534 = vmul.f32 %v530, %v75
    %536 = vset.pattern.permute.xlu0 0
    %537 = vperm.xlu0 %536, %v531
    %v538 = vpop.permute.xlu0 %537
    %541 = vset.pattern.permute.xlu0 0
    %542 = vperm.xlu0 %541, %v532
    %v543 = vpop.permute.xlu0 %542
    %546 = vset.pattern.permute.xlu0 0
    %547 = vperm.xlu0 %546, %v533
    %v548 = vpop.permute.xlu0 %547
    %551 = vset.pattern.permute.xlu0 0
    %552 = vperm.xlu0 %551, %v534
    %v553 = vpop.permute.xlu0 %552
    %v555 = vmul.f32 %v443, %v538
    %v556 = vmul.f32 %v444, %v543
    %v557 = vmul.f32 %v445, %v548
    %v558 = vmul.f32 %v446, %v553
    %v559 = vmul.f32 %v459, %v531
    %v560 = vmul.f32 %v460, %v532
    %v561 = vmul.f32 %v461, %v533
    %v562 = vmul.f32 %v462, %v534
    %v563 = vsub.f32 %v76, %v559
    %v564 = vsub.f32 %v77, %v560
    %v565 = vsub.f32 %v78, %v561
    %v566 = vsub.f32 %v79, %v562
    %568 = vset.pattern.permute.xlu0 0
    %569 = vperm.xlu0 %568, %v563
    %v570 = vpop.permute.xlu0 %569
    %573 = vset.pattern.permute.xlu0 0
    %574 = vperm.xlu0 %573, %v564
    %v575 = vpop.permute.xlu0 %574
    %578 = vset.pattern.permute.xlu0 0
    %579 = vperm.xlu0 %578, %v565
    %v580 = vpop.permute.xlu0 %579
    %583 = vset.pattern.permute.xlu0 0
    %584 = vperm.xlu0 %583, %v566
    %v585 = vpop.permute.xlu0 %584
    %v587 = vadd.f32 %v555, %v570
    %v588 = vadd.f32 %v556, %v575
    %v589 = vadd.f32 %v557, %v580
    %v590 = vadd.f32 %v558, %v585
    %s591 = scalar_lea.vmem %s2, 32
    %v592 = vld [vmem:[%s591] sm:$0xff]
    %v593 = vld [vmem:[%s591 + $0x8] sm:$0xff]
    %v594 = vld [vmem:[%s591 + $0x10] sm:$0xff]
    %v595 = vld [vmem:[%s591 + $0x18] sm:$0xff]
    %596 = vrot.lane.b32.xlu0 %v587, 2
    %v597 = vpop.permute.xlu0 %596
    %598 = vrot.lane.b32.xlu0 %v588, 2
    %v599 = vpop.permute.xlu0 %598
    %600 = vrot.lane.b32.xlu0 %v589, 2
    %v601 = vpop.permute.xlu0 %600
    %602 = vrot.lane.b32.xlu0 %v590, 2
    %v603 = vpop.permute.xlu0 %602
    %v604 = vmul.f32 %v597, %v41
    %v605 = vmul.f32 %v599, %v41
    %v606 = vmul.f32 %v601, %v41
    %v607 = vmul.f32 %v603, %v41
    %608 = vrot.lane.b32.xlu0 %v587, 1
    %v609 = vpop.permute.xlu0 %608
    %610 = vrot.lane.b32.xlu0 %v588, 1
    %v611 = vpop.permute.xlu0 %610
    %612 = vrot.lane.b32.xlu0 %v589, 1
    %v613 = vpop.permute.xlu0 %612
    %614 = vrot.lane.b32.xlu0 %v590, 1
    %v615 = vpop.permute.xlu0 %614
    %v616 = vmul.f32 %v609, %v47
    %v617 = vmul.f32 %v611, %v47
    %v618 = vmul.f32 %v613, %v47
    %v619 = vmul.f32 %v615, %v47
    %620 = vrot.lane.b32.xlu0 %v587, 127
    %v621 = vpop.permute.xlu0 %620
    %622 = vrot.lane.b32.xlu0 %v588, 127
    %v623 = vpop.permute.xlu0 %622
    %624 = vrot.lane.b32.xlu0 %v589, 127
    %v625 = vpop.permute.xlu0 %624
    %626 = vrot.lane.b32.xlu0 %v590, 127
    %v627 = vpop.permute.xlu0 %626
    %v628 = vmul.f32 %v621, %v53
    %v629 = vmul.f32 %v623, %v53
    %v630 = vmul.f32 %v625, %v53
    %v631 = vmul.f32 %v627, %v53
    %632 = vrot.lane.b32.xlu0 %v587, 126
    %v633 = vpop.permute.xlu0 %632
    %634 = vrot.lane.b32.xlu0 %v588, 126
    %v635 = vpop.permute.xlu0 %634
    %636 = vrot.lane.b32.xlu0 %v589, 126
    %v637 = vpop.permute.xlu0 %636
    %638 = vrot.lane.b32.xlu0 %v590, 126
    %v639 = vpop.permute.xlu0 %638
    %v640 = vmul.f32 %v633, %v59
    %v641 = vmul.f32 %v635, %v59
    %v642 = vmul.f32 %v637, %v59
    %v643 = vmul.f32 %v639, %v59
    %v644 = vpack.c.bf16 %v605, %v604
    %v645 = vpack.c.bf16 %v607, %v606
    %v646 = vpack.c.bf16 %v617, %v616
    %v647 = vpack.c.bf16 %v619, %v618
    %v648 = vpack.c.bf16 %v588, %v587
    %v649 = vpack.c.bf16 %v590, %v589
    %v650 = vpack.c.bf16 %v629, %v628
    %v651 = vpack.c.bf16 %v631, %v630
    %v652 = vpack.c.bf16 %v641, %v640
    %v653 = vpack.c.bf16 %v643, %v642
    %v658 = vunpack.c.l.b16 %v592
    %v659 = vunpack.c.h.b16 %v592
    %v660 = vunpack.c.l.b16 %v593
    %v661 = vunpack.c.h.b16 %v593
    %v662 = vunpack.c.l.b16 %v594
    %v663 = vunpack.c.h.b16 %v594
    %v664 = vunpack.c.l.b16 %v595
    %v665 = vunpack.c.h.b16 %v595
    %v666 = vpack.c.b16 %v660, %v658
    %v667 = vpack.c.b16 %v661, %v659
    %v668 = vpack.c.b16 %v664, %v662
    %v669 = vpack.c.b16 %v665, %v663
    %v673 = vsel %vm398, %v667, 0
    %v676 = vsel %vm398, %v669, 0
    %678 = vmatpush.bf16.msra.mxu0 %v651
    %679 = vmatpush.bf16.msra.mxu0 %v650
    %680 = vmatpush.bf16.msra.mxu0 %v649
    %681 = vmatpush.bf16.msra.mxu0 %v648
    %682 = vmatpush.bf16.msra.mxu0 %v647
    %683 = vmatpush.bf16.msra.mxu0 %v646
    %684 = vmatpush.bf16.msra.mxu0 %v645
    %685 = vmatpush.bf16.msra.mxu0 %v644
    %686 = vmatmul.bf16.gmra.mxu0 %v666
    %v687 = vpop.f32.mrf.mxu0
    %v688 = vadd.f32 0.0, %v687
    %v689 = vpop.f32.mrf.mxu0
    %v690 = vadd.f32 0.0, %v689
    %691 = vmatmul.bf16.gmra.mxu0 %v668
    %v692 = vpop.f32.mrf.mxu0
    %v693 = vadd.f32 0.0, %v692
    %v694 = vpop.f32.mrf.mxu0
    %v695 = vadd.f32 0.0, %v694
    %696 = vdwg.mxu0
    %697 = vmatpush.bf16.msra.mxu0 0
    %698 = vmatpush.bf16.msra.mxu0 0
    %699 = vmatpush.bf16.msra.mxu0 0
    %700 = vmatpush.bf16.msra.mxu0 0
    %701 = vmatpush.bf16.msra.mxu0 0
    %702 = vmatpush.bf16.msra.mxu0 0
    %703 = vmatpush.bf16.msra.mxu0 %v653
    %704 = vmatpush.bf16.msra.mxu0 %v652
    %705 = vmatmul.bf16.gmra.mxu0 %v673
    %v706 = vpop.f32.mrf.mxu0
    %v707 = vadd.f32 %v688, %v706
    %v708 = vpop.f32.mrf.mxu0
    %v709 = vadd.f32 %v690, %v708
    %710 = vmatmul.bf16.gmra.mxu0 %v676
    %v711 = vpop.f32.mrf.mxu0
    %v712 = vadd.f32 %v693, %v711
    %v713 = vpop.f32.mrf.mxu0
    %v714 = vadd.f32 %v695, %v713
    %715 = vdwg.mxu0
    %v716 = vmul.f32 %v707, %v35
    %v717 = vmul.f32 %v709, %v35
    %v718 = vmul.f32 %v712, %v35
    %v719 = vmul.f32 %v714, %v35
    %720 = vadd.xlane.f32.xlu0 %v716
    %v721 = vpop.xlane.xlu0 %720
    %722 = vadd.xlane.f32.xlu0 %v717
    %v723 = vpop.xlane.xlu0 %722
    %724 = vadd.xlane.f32.xlu0 %v718
    %v725 = vpop.xlane.xlu0 %724
    %726 = vadd.xlane.f32.xlu0 %v719
    %v727 = vpop.xlane.xlu0 %726
    %v728 = vmul.f32 %v721, 0.03125
    %v729 = vmul.f32 %v723, 0.03125
    %v730 = vmul.f32 %v725, 0.03125
    %v731 = vmul.f32 %v727, 0.03125
    %v732 = vsub.f32 %v707, %v728
    %v733 = vsub.f32 %v709, %v729
    %v734 = vsub.f32 %v712, %v730
    %v735 = vsub.f32 %v714, %v731
    %v736 = vmul.f32 %v732, %v35
    %v737 = vmul.f32 %v733, %v35
    %v738 = vmul.f32 %v734, %v35
    %v739 = vmul.f32 %v735, %v35
    %v740 = vmul.f32 %v736, %v736
    %v741 = vmul.f32 %v737, %v737
    %v742 = vmul.f32 %v738, %v738
    %v743 = vmul.f32 %v739, %v739
    %744 = vadd.xlane.f32.xlu0 %v740
    %v745 = vpop.xlane.xlu0 %744
    %746 = vadd.xlane.f32.xlu0 %v741
    %v747 = vpop.xlane.xlu0 %746
    %748 = vadd.xlane.f32.xlu0 %v742
    %v749 = vpop.xlane.xlu0 %748
    %750 = vadd.xlane.f32.xlu0 %v743
    %v751 = vpop.xlane.xlu0 %750
    %v752 = vmul.f32 %v745, 0.03125
    %v753 = vmul.f32 %v747, 0.03125
    %v754 = vmul.f32 %v749, 0.03125
    %v755 = vmul.f32 %v751, 0.03125
    %v756 = vadd.f32 %v752, 1e-05
    %v757 = vadd.f32 %v753, 1e-05
    %v758 = vadd.f32 %v754, 1e-05
    %v759 = vadd.f32 %v755, 1e-05
    %v760 = vrsqrt.pop %v756
    %v761 = vmul.f32 %v760, %v756
    %v762 = vmul.f32 %v761, %v760
    %v763 = vmul.f32 0.5, %v762
    %v764 = vsub.f32 1.5, %v763
    %v765 = vmul.f32 %v760, %v764
    %vm766 = vweird.f32 %v756
    %vm767 = vweird.f32 %v760
    %vm768 = vmor %vm766, %vm767
    %v769 = vsel %vm768, %v760, %v765
    %v770 = vrsqrt.pop %v757
    %v771 = vmul.f32 %v770, %v757
    %v772 = vmul.f32 %v771, %v770
    %v773 = vmul.f32 0.5, %v772
    %v774 = vsub.f32 1.5, %v773
    %v775 = vmul.f32 %v770, %v774
    %vm776 = vweird.f32 %v757
    %vm777 = vweird.f32 %v770
    %vm778 = vmor %vm776, %vm777
    %v779 = vsel %vm778, %v770, %v775
    %v780 = vrsqrt.pop %v758
    %v781 = vmul.f32 %v780, %v758
    %v782 = vmul.f32 %v781, %v780
    %v783 = vmul.f32 0.5, %v782
    %v784 = vsub.f32 1.5, %v783
    %v785 = vmul.f32 %v780, %v784
    %vm786 = vweird.f32 %v758
    %vm787 = vweird.f32 %v780
    %vm788 = vmor %vm786, %vm787
    %v789 = vsel %vm788, %v780, %v785
    %v790 = vrsqrt.pop %v759
    %v791 = vmul.f32 %v790, %v759
    %v792 = vmul.f32 %v791, %v790
    %v793 = vmul.f32 0.5, %v792
    %v794 = vsub.f32 1.5, %v793
    %v795 = vmul.f32 %v790, %v794
    %vm796 = vweird.f32 %v759
    %vm797 = vweird.f32 %v790
    %vm798 = vmor %vm796, %vm797
    %v799 = vsel %vm798, %v790, %v795
    %v800 = vmul.f32 %v769, %v80
    %v801 = vmul.f32 %v779, %v81
    %v802 = vmul.f32 %v789, %v82
    %v803 = vmul.f32 %v799, %v83
    %805 = vset.pattern.permute.xlu0 0
    %806 = vperm.xlu0 %805, %v800
    %v807 = vpop.permute.xlu0 %806
    %810 = vset.pattern.permute.xlu0 0
    %811 = vperm.xlu0 %810, %v801
    %v812 = vpop.permute.xlu0 %811
    %815 = vset.pattern.permute.xlu0 0
    %816 = vperm.xlu0 %815, %v802
    %v817 = vpop.permute.xlu0 %816
    %820 = vset.pattern.permute.xlu0 0
    %821 = vperm.xlu0 %820, %v803
    %v822 = vpop.permute.xlu0 %821
    %v824 = vmul.f32 %v707, %v807
    %v825 = vmul.f32 %v709, %v812
    %v826 = vmul.f32 %v712, %v817
    %v827 = vmul.f32 %v714, %v822
    %v828 = vmul.f32 %v728, %v800
    %v829 = vmul.f32 %v729, %v801
    %v830 = vmul.f32 %v730, %v802
    %v831 = vmul.f32 %v731, %v803
    %v832 = vsub.f32 %v84, %v828
    %v833 = vsub.f32 %v85, %v829
    %v834 = vsub.f32 %v86, %v830
    %v835 = vsub.f32 %v87, %v831
    %837 = vset.pattern.permute.xlu0 0
    %838 = vperm.xlu0 %837, %v832
    %v839 = vpop.permute.xlu0 %838
    %842 = vset.pattern.permute.xlu0 0
    %843 = vperm.xlu0 %842, %v833
    %v844 = vpop.permute.xlu0 %843
    %847 = vset.pattern.permute.xlu0 0
    %848 = vperm.xlu0 %847, %v834
    %v849 = vpop.permute.xlu0 %848
    %852 = vset.pattern.permute.xlu0 0
    %853 = vperm.xlu0 %852, %v835
    %v854 = vpop.permute.xlu0 %853
    %v856 = vadd.f32 %v824, %v839
    %v857 = vadd.f32 %v825, %v844
    %v858 = vadd.f32 %v826, %v849
    %v859 = vadd.f32 %v827, %v854
    %v860 = vadd.f32 %v856, %v294
    %v861 = vadd.f32 %v857, %v295
    %v862 = vadd.f32 %v858, %v296
    %v863 = vadd.f32 %v859, %v297
    %s864 = scalar_lea.vmem %s2, 64
    %v865 = vld [vmem:[%s864] sm:$0xff]
    %v866 = vld [vmem:[%s864 + $0x8] sm:$0xff]
    %v867 = vld [vmem:[%s864 + $0x10] sm:$0xff]
    %v868 = vld [vmem:[%s864 + $0x18] sm:$0xff]
    %869 = vrot.lane.b32.xlu0 %v860, 2
    %v870 = vpop.permute.xlu0 %869
    %871 = vrot.lane.b32.xlu0 %v861, 2
    %v872 = vpop.permute.xlu0 %871
    %873 = vrot.lane.b32.xlu0 %v862, 2
    %v874 = vpop.permute.xlu0 %873
    %875 = vrot.lane.b32.xlu0 %v863, 2
    %v876 = vpop.permute.xlu0 %875
    %v877 = vmul.f32 %v870, %v41
    %v878 = vmul.f32 %v872, %v41
    %v879 = vmul.f32 %v874, %v41
    %v880 = vmul.f32 %v876, %v41
    %881 = vrot.lane.b32.xlu0 %v860, 1
    %v882 = vpop.permute.xlu0 %881
    %883 = vrot.lane.b32.xlu0 %v861, 1
    %v884 = vpop.permute.xlu0 %883
    %885 = vrot.lane.b32.xlu0 %v862, 1
    %v886 = vpop.permute.xlu0 %885
    %887 = vrot.lane.b32.xlu0 %v863, 1
    %v888 = vpop.permute.xlu0 %887
    %v889 = vmul.f32 %v882, %v47
    %v890 = vmul.f32 %v884, %v47
    %v891 = vmul.f32 %v886, %v47
    %v892 = vmul.f32 %v888, %v47
    %893 = vrot.lane.b32.xlu0 %v860, 127
    %v894 = vpop.permute.xlu0 %893
    %895 = vrot.lane.b32.xlu0 %v861, 127
    %v896 = vpop.permute.xlu0 %895
    %897 = vrot.lane.b32.xlu0 %v862, 127
    %v898 = vpop.permute.xlu0 %897
    %899 = vrot.lane.b32.xlu0 %v863, 127
    %v900 = vpop.permute.xlu0 %899
    %v901 = vmul.f32 %v894, %v53
    %v902 = vmul.f32 %v896, %v53
    %v903 = vmul.f32 %v898, %v53
    %v904 = vmul.f32 %v900, %v53
    %905 = vrot.lane.b32.xlu0 %v860, 126
    %v906 = vpop.permute.xlu0 %905
    %907 = vrot.lane.b32.xlu0 %v861, 126
    %v908 = vpop.permute.xlu0 %907
    %909 = vrot.lane.b32.xlu0 %v862, 126
    %v910 = vpop.permute.xlu0 %909
    %911 = vrot.lane.b32.xlu0 %v863, 126
    %v912 = vpop.permute.xlu0 %911
    %v913 = vmul.f32 %v906, %v59
    %v914 = vmul.f32 %v908, %v59
    %v915 = vmul.f32 %v910, %v59
    %v916 = vmul.f32 %v912, %v59
    %v917 = vpack.c.bf16 %v878, %v877
    %v918 = vpack.c.bf16 %v880, %v879
    %v919 = vpack.c.bf16 %v890, %v889
    %v920 = vpack.c.bf16 %v892, %v891
    %v921 = vpack.c.bf16 %v861, %v860
    %v922 = vpack.c.bf16 %v863, %v862
    %v923 = vpack.c.bf16 %v902, %v901
    %v924 = vpack.c.bf16 %v904, %v903
    %v925 = vpack.c.bf16 %v914, %v913
    %v926 = vpack.c.bf16 %v916, %v915
    %928 = vset.pattern.permute.xlu0 0
    %929 = vperm.xlu0 %928, %v88
    %v930 = vpop.permute.xlu0 %929
    %933 = vset.pattern.permute.xlu0 0
    %934 = vperm.xlu0 %933, %v89
    %v935 = vpop.permute.xlu0 %934
    %938 = vset.pattern.permute.xlu0 0
    %939 = vperm.xlu0 %938, %v90
    %v940 = vpop.permute.xlu0 %939
    %943 = vset.pattern.permute.xlu0 0
    %944 = vperm.xlu0 %943, %v91
    %v945 = vpop.permute.xlu0 %944
    %v951 = vunpack.c.l.b16 %v865
    %v952 = vunpack.c.h.b16 %v865
    %v953 = vunpack.c.l.b16 %v866
    %v954 = vunpack.c.h.b16 %v866
    %v955 = vunpack.c.l.b16 %v867
    %v956 = vunpack.c.h.b16 %v867
    %v957 = vunpack.c.l.b16 %v868
    %v958 = vunpack.c.h.b16 %v868
    %v959 = vpack.c.b16 %v953, %v951
    %v960 = vpack.c.b16 %v954, %v952
    %v961 = vpack.c.b16 %v957, %v955
    %v962 = vpack.c.b16 %v958, %v956
    %v966 = vsel %vm398, %v960, 0
    %v969 = vsel %vm398, %v962, 0
    %971 = vmatpush.bf16.msra.mxu0 %v924
    %972 = vmatpush.bf16.msra.mxu0 %v923
    %973 = vmatpush.bf16.msra.mxu0 %v922
    %974 = vmatpush.bf16.msra.mxu0 %v921
    %975 = vmatpush.bf16.msra.mxu0 %v920
    %976 = vmatpush.bf16.msra.mxu0 %v919
    %977 = vmatpush.bf16.msra.mxu0 %v918
    %978 = vmatpush.bf16.msra.mxu0 %v917
    %979 = vmatmul.bf16.gmra.mxu0 %v959
    %v980 = vpop.f32.mrf.mxu0
    %v981 = vadd.f32 %v930, %v980
    %v982 = vpop.f32.mrf.mxu0
    %v983 = vadd.f32 %v935, %v982
    %984 = vmatmul.bf16.gmra.mxu0 %v961
    %v985 = vpop.f32.mrf.mxu0
    %v986 = vadd.f32 %v940, %v985
    %v987 = vpop.f32.mrf.mxu0
    %v988 = vadd.f32 %v945, %v987
    %989 = vdwg.mxu0
    %990 = vmatpush.bf16.msra.mxu0 0
    %991 = vmatpush.bf16.msra.mxu0 0
    %992 = vmatpush.bf16.msra.mxu0 0
    %993 = vmatpush.bf16.msra.mxu0 0
    %994 = vmatpush.bf16.msra.mxu0 0
    %995 = vmatpush.bf16.msra.mxu0 0
    %996 = vmatpush.bf16.msra.mxu0 %v926
    %997 = vmatpush.bf16.msra.mxu0 %v925
    %998 = vmatmul.bf16.gmra.mxu0 %v966
    %v999 = vpop.f32.mrf.mxu0
    %v1000 = vadd.f32 %v981, %v999
    %v1001 = vpop.f32.mrf.mxu0
    %v1002 = vadd.f32 %v983, %v1001
    %1003 = vmatmul.bf16.gmra.mxu0 %v969
    %v1004 = vpop.f32.mrf.mxu0
    %v1005 = vadd.f32 %v986, %v1004
    %v1006 = vpop.f32.mrf.mxu0
    %v1007 = vadd.f32 %v988, %v1006
    %1008 = vdwg.mxu0
    %v1009 = vmax.f32 %v1000, 0.0
    %v1010 = vmax.f32 %v1002, 0.0
    %v1011 = vmax.f32 %v1005, 0.0
    %v1012 = vmax.f32 %v1007, 0.0
    %v1013 = vmul.f32 %v1009, %v35
    %v1014 = vmul.f32 %v1010, %v35
    %v1015 = vmul.f32 %v1011, %v35
    %v1016 = vmul.f32 %v1012, %v35
    %1017 = vadd.xlane.f32.xlu0 %v1013
    %v1018 = vpop.xlane.xlu0 %1017
    %1019 = vadd.xlane.f32.xlu0 %v1014
    %v1020 = vpop.xlane.xlu0 %1019
    %1021 = vadd.xlane.f32.xlu0 %v1015
    %v1022 = vpop.xlane.xlu0 %1021
    %1023 = vadd.xlane.f32.xlu0 %v1016
    %v1024 = vpop.xlane.xlu0 %1023
    %v1025 = vmul.f32 %v1018, 0.03125
    %v1026 = vmul.f32 %v1020, 0.03125
    %v1027 = vmul.f32 %v1022, 0.03125
    %v1028 = vmul.f32 %v1024, 0.03125
    %v1029 = vsub.f32 %v1009, %v1025
    %v1030 = vsub.f32 %v1010, %v1026
    %v1031 = vsub.f32 %v1011, %v1027
    %v1032 = vsub.f32 %v1012, %v1028
    %v1033 = vmul.f32 %v1029, %v35
    %v1034 = vmul.f32 %v1030, %v35
    %v1035 = vmul.f32 %v1031, %v35
    %v1036 = vmul.f32 %v1032, %v35
    %v1037 = vmul.f32 %v1033, %v1033
    %v1038 = vmul.f32 %v1034, %v1034
    %v1039 = vmul.f32 %v1035, %v1035
    %v1040 = vmul.f32 %v1036, %v1036
    %1041 = vadd.xlane.f32.xlu0 %v1037
    %v1042 = vpop.xlane.xlu0 %1041
    %1043 = vadd.xlane.f32.xlu0 %v1038
    %v1044 = vpop.xlane.xlu0 %1043
    %1045 = vadd.xlane.f32.xlu0 %v1039
    %v1046 = vpop.xlane.xlu0 %1045
    %1047 = vadd.xlane.f32.xlu0 %v1040
    %v1048 = vpop.xlane.xlu0 %1047
    %v1049 = vmul.f32 %v1042, 0.03125
    %v1050 = vmul.f32 %v1044, 0.03125
    %v1051 = vmul.f32 %v1046, 0.03125
    %v1052 = vmul.f32 %v1048, 0.03125
    %v1053 = vadd.f32 %v1049, 1e-05
    %v1054 = vadd.f32 %v1050, 1e-05
    %v1055 = vadd.f32 %v1051, 1e-05
    %v1056 = vadd.f32 %v1052, 1e-05
    %v1057 = vrsqrt.pop %v1053
    %v1058 = vmul.f32 %v1057, %v1053
    %v1059 = vmul.f32 %v1058, %v1057
    %v1060 = vmul.f32 0.5, %v1059
    %v1061 = vsub.f32 1.5, %v1060
    %v1062 = vmul.f32 %v1057, %v1061
    %vm1063 = vweird.f32 %v1053
    %vm1064 = vweird.f32 %v1057
    %vm1065 = vmor %vm1063, %vm1064
    %v1066 = vsel %vm1065, %v1057, %v1062
    %v1067 = vrsqrt.pop %v1054
    %v1068 = vmul.f32 %v1067, %v1054
    %v1069 = vmul.f32 %v1068, %v1067
    %v1070 = vmul.f32 0.5, %v1069
    %v1071 = vsub.f32 1.5, %v1070
    %v1072 = vmul.f32 %v1067, %v1071
    %vm1073 = vweird.f32 %v1054
    %vm1074 = vweird.f32 %v1067
    %vm1075 = vmor %vm1073, %vm1074
    %v1076 = vsel %vm1075, %v1067, %v1072
    %v1077 = vrsqrt.pop %v1055
    %v1078 = vmul.f32 %v1077, %v1055
    %v1079 = vmul.f32 %v1078, %v1077
    %v1080 = vmul.f32 0.5, %v1079
    %v1081 = vsub.f32 1.5, %v1080
    %v1082 = vmul.f32 %v1077, %v1081
    %vm1083 = vweird.f32 %v1055
    %vm1084 = vweird.f32 %v1077
    %vm1085 = vmor %vm1083, %vm1084
    %v1086 = vsel %vm1085, %v1077, %v1082
    %v1087 = vrsqrt.pop %v1056
    %v1088 = vmul.f32 %v1087, %v1056
    %v1089 = vmul.f32 %v1088, %v1087
    %v1090 = vmul.f32 0.5, %v1089
    %v1091 = vsub.f32 1.5, %v1090
    %v1092 = vmul.f32 %v1087, %v1091
    %vm1093 = vweird.f32 %v1056
    %vm1094 = vweird.f32 %v1087
    %vm1095 = vmor %vm1093, %vm1094
    %v1096 = vsel %vm1095, %v1087, %v1092
    %v1097 = vmul.f32 %v1066, %v92
    %v1098 = vmul.f32 %v1076, %v93
    %v1099 = vmul.f32 %v1086, %v94
    %v1100 = vmul.f32 %v1096, %v95
    %1102 = vset.pattern.permute.xlu0 0
    %1103 = vperm.xlu0 %1102, %v1097
    %v1104 = vpop.permute.xlu0 %1103
    %1107 = vset.pattern.permute.xlu0 0
    %1108 = vperm.xlu0 %1107, %v1098
    %v1109 = vpop.permute.xlu0 %1108
    %1112 = vset.pattern.permute.xlu0 0
    %1113 = vperm.xlu0 %1112, %v1099
    %v1114 = vpop.permute.xlu0 %1113
    %1117 = vset.pattern.permute.xlu0 0
    %1118 = vperm.xlu0 %1117, %v1100
    %v1119 = vpop.permute.xlu0 %1118
    %v1121 = vmul.f32 %v1009, %v1104
    %v1122 = vmul.f32 %v1010, %v1109
    %v1123 = vmul.f32 %v1011, %v1114
    %v1124 = vmul.f32 %v1012, %v1119
    %v1125 = vmul.f32 %v1025, %v1097
    %v1126 = vmul.f32 %v1026, %v1098
    %v1127 = vmul.f32 %v1027, %v1099
    %v1128 = vmul.f32 %v1028, %v1100
    %v1129 = vsub.f32 %v96, %v1125
    %v1130 = vsub.f32 %v97, %v1126
    %v1131 = vsub.f32 %v98, %v1127
    %v1132 = vsub.f32 %v99, %v1128
    %1134 = vset.pattern.permute.xlu0 0
    %1135 = vperm.xlu0 %1134, %v1129
    %v1136 = vpop.permute.xlu0 %1135
    %1139 = vset.pattern.permute.xlu0 0
    %1140 = vperm.xlu0 %1139, %v1130
    %v1141 = vpop.permute.xlu0 %1140
    %1144 = vset.pattern.permute.xlu0 0
    %1145 = vperm.xlu0 %1144, %v1131
    %v1146 = vpop.permute.xlu0 %1145
    %1149 = vset.pattern.permute.xlu0 0
    %1150 = vperm.xlu0 %1149, %v1132
    %v1151 = vpop.permute.xlu0 %1150
    %v1153 = vadd.f32 %v1121, %v1136
    %v1154 = vadd.f32 %v1122, %v1141
    %v1155 = vadd.f32 %v1123, %v1146
    %v1156 = vadd.f32 %v1124, %v1151
    %s1157 = scalar_lea.vmem %s2, 96
    %v1158 = vld [vmem:[%s1157] sm:$0xff]
    %v1159 = vld [vmem:[%s1157 + $0x8] sm:$0xff]
    %v1160 = vld [vmem:[%s1157 + $0x10] sm:$0xff]
    %v1161 = vld [vmem:[%s1157 + $0x18] sm:$0xff]
    %1162 = vrot.lane.b32.xlu0 %v1153, 2
    %v1163 = vpop.permute.xlu0 %1162
    %1164 = vrot.lane.b32.xlu0 %v1154, 2
    %v1165 = vpop.permute.xlu0 %1164
    %1166 = vrot.lane.b32.xlu0 %v1155, 2
    %v1167 = vpop.permute.xlu0 %1166
    %1168 = vrot.lane.b32.xlu0 %v1156, 2
    %v1169 = vpop.permute.xlu0 %1168
    %v1170 = vmul.f32 %v1163, %v41
    %v1171 = vmul.f32 %v1165, %v41
    %v1172 = vmul.f32 %v1167, %v41
    %v1173 = vmul.f32 %v1169, %v41
    %1174 = vrot.lane.b32.xlu0 %v1153, 1
    %v1175 = vpop.permute.xlu0 %1174
    %1176 = vrot.lane.b32.xlu0 %v1154, 1
    %v1177 = vpop.permute.xlu0 %1176
    %1178 = vrot.lane.b32.xlu0 %v1155, 1
    %v1179 = vpop.permute.xlu0 %1178
    %1180 = vrot.lane.b32.xlu0 %v1156, 1
    %v1181 = vpop.permute.xlu0 %1180
    %v1182 = vmul.f32 %v1175, %v47
    %v1183 = vmul.f32 %v1177, %v47
    %v1184 = vmul.f32 %v1179, %v47
    %v1185 = vmul.f32 %v1181, %v47
    %1186 = vrot.lane.b32.xlu0 %v1153, 127
    %v1187 = vpop.permute.xlu0 %1186
    %1188 = vrot.lane.b32.xlu0 %v1154, 127
    %v1189 = vpop.permute.xlu0 %1188
    %1190 = vrot.lane.b32.xlu0 %v1155, 127
    %v1191 = vpop.permute.xlu0 %1190
    %1192 = vrot.lane.b32.xlu0 %v1156, 127
    %v1193 = vpop.permute.xlu0 %1192
    %v1194 = vmul.f32 %v1187, %v53
    %v1195 = vmul.f32 %v1189, %v53
    %v1196 = vmul.f32 %v1191, %v53
    %v1197 = vmul.f32 %v1193, %v53
    %1198 = vrot.lane.b32.xlu0 %v1153, 126
    %v1199 = vpop.permute.xlu0 %1198
    %1200 = vrot.lane.b32.xlu0 %v1154, 126
    %v1201 = vpop.permute.xlu0 %1200
    %1202 = vrot.lane.b32.xlu0 %v1155, 126
    %v1203 = vpop.permute.xlu0 %1202
    %1204 = vrot.lane.b32.xlu0 %v1156, 126
    %v1205 = vpop.permute.xlu0 %1204
    %v1206 = vmul.f32 %v1199, %v59
    %v1207 = vmul.f32 %v1201, %v59
    %v1208 = vmul.f32 %v1203, %v59
    %v1209 = vmul.f32 %v1205, %v59
    %v1210 = vpack.c.bf16 %v1171, %v1170
    %v1211 = vpack.c.bf16 %v1173, %v1172
    %v1212 = vpack.c.bf16 %v1183, %v1182
    %v1213 = vpack.c.bf16 %v1185, %v1184
    %v1214 = vpack.c.bf16 %v1154, %v1153
    %v1215 = vpack.c.bf16 %v1156, %v1155
    %v1216 = vpack.c.bf16 %v1195, %v1194
    %v1217 = vpack.c.bf16 %v1197, %v1196
    %v1218 = vpack.c.bf16 %v1207, %v1206
    %v1219 = vpack.c.bf16 %v1209, %v1208
    %v1224 = vunpack.c.l.b16 %v1158
    %v1225 = vunpack.c.h.b16 %v1158
    %v1226 = vunpack.c.l.b16 %v1159
    %v1227 = vunpack.c.h.b16 %v1159
    %v1228 = vunpack.c.l.b16 %v1160
    %v1229 = vunpack.c.h.b16 %v1160
    %v1230 = vunpack.c.l.b16 %v1161
    %v1231 = vunpack.c.h.b16 %v1161
    %v1232 = vpack.c.b16 %v1226, %v1224
    %v1233 = vpack.c.b16 %v1227, %v1225
    %v1234 = vpack.c.b16 %v1230, %v1228
    %v1235 = vpack.c.b16 %v1231, %v1229
    %v1239 = vsel %vm398, %v1233, 0
    %v1242 = vsel %vm398, %v1235, 0
    %1244 = vmatpush.bf16.msra.mxu0 %v1217
    %1245 = vmatpush.bf16.msra.mxu0 %v1216
    %1246 = vmatpush.bf16.msra.mxu0 %v1215
    %1247 = vmatpush.bf16.msra.mxu0 %v1214
    %1248 = vmatpush.bf16.msra.mxu0 %v1213
    %1249 = vmatpush.bf16.msra.mxu0 %v1212
    %1250 = vmatpush.bf16.msra.mxu0 %v1211
    %1251 = vmatpush.bf16.msra.mxu0 %v1210
    %1252 = vmatmul.bf16.gmra.mxu0 %v1232
    %v1253 = vpop.f32.mrf.mxu0
    %v1254 = vadd.f32 0.0, %v1253
    %v1255 = vpop.f32.mrf.mxu0
    %v1256 = vadd.f32 0.0, %v1255
    %1257 = vmatmul.bf16.gmra.mxu0 %v1234
    %v1258 = vpop.f32.mrf.mxu0
    %v1259 = vadd.f32 0.0, %v1258
    %v1260 = vpop.f32.mrf.mxu0
    %v1261 = vadd.f32 0.0, %v1260
    %1262 = vdwg.mxu0
    %1263 = vmatpush.bf16.msra.mxu0 0
    %1264 = vmatpush.bf16.msra.mxu0 0
    %1265 = vmatpush.bf16.msra.mxu0 0
    %1266 = vmatpush.bf16.msra.mxu0 0
    %1267 = vmatpush.bf16.msra.mxu0 0
    %1268 = vmatpush.bf16.msra.mxu0 0
    %1269 = vmatpush.bf16.msra.mxu0 %v1219
    %1270 = vmatpush.bf16.msra.mxu0 %v1218
    %1271 = vmatmul.bf16.gmra.mxu0 %v1239
    %v1272 = vpop.f32.mrf.mxu0
    %v1273 = vadd.f32 %v1254, %v1272
    %v1274 = vpop.f32.mrf.mxu0
    %v1275 = vadd.f32 %v1256, %v1274
    %1276 = vmatmul.bf16.gmra.mxu0 %v1242
    %v1277 = vpop.f32.mrf.mxu0
    %v1278 = vadd.f32 %v1259, %v1277
    %v1279 = vpop.f32.mrf.mxu0
    %v1280 = vadd.f32 %v1261, %v1279
    %1281 = vdwg.mxu0
    %v1282 = vmul.f32 %v1273, %v35
    %v1283 = vmul.f32 %v1275, %v35
    %v1284 = vmul.f32 %v1278, %v35
    %v1285 = vmul.f32 %v1280, %v35
    %1286 = vadd.xlane.f32.xlu0 %v1282
    %v1287 = vpop.xlane.xlu0 %1286
    %1288 = vadd.xlane.f32.xlu0 %v1283
    %v1289 = vpop.xlane.xlu0 %1288
    %1290 = vadd.xlane.f32.xlu0 %v1284
    %v1291 = vpop.xlane.xlu0 %1290
    %1292 = vadd.xlane.f32.xlu0 %v1285
    %v1293 = vpop.xlane.xlu0 %1292
    %v1294 = vmul.f32 %v1287, 0.03125
    %v1295 = vmul.f32 %v1289, 0.03125
    %v1296 = vmul.f32 %v1291, 0.03125
    %v1297 = vmul.f32 %v1293, 0.03125
    %v1298 = vsub.f32 %v1273, %v1294
    %v1299 = vsub.f32 %v1275, %v1295
    %v1300 = vsub.f32 %v1278, %v1296
    %v1301 = vsub.f32 %v1280, %v1297
    %v1302 = vmul.f32 %v1298, %v35
    %v1303 = vmul.f32 %v1299, %v35
    %v1304 = vmul.f32 %v1300, %v35
    %v1305 = vmul.f32 %v1301, %v35
    %v1306 = vmul.f32 %v1302, %v1302
    %v1307 = vmul.f32 %v1303, %v1303
    %v1308 = vmul.f32 %v1304, %v1304
    %v1309 = vmul.f32 %v1305, %v1305
    %1310 = vadd.xlane.f32.xlu0 %v1306
    %v1311 = vpop.xlane.xlu0 %1310
    %1312 = vadd.xlane.f32.xlu0 %v1307
    %v1313 = vpop.xlane.xlu0 %1312
    %1314 = vadd.xlane.f32.xlu0 %v1308
    %v1315 = vpop.xlane.xlu0 %1314
    %1316 = vadd.xlane.f32.xlu0 %v1309
    %v1317 = vpop.xlane.xlu0 %1316
    %v1318 = vmul.f32 %v1311, 0.03125
    %v1319 = vmul.f32 %v1313, 0.03125
    %v1320 = vmul.f32 %v1315, 0.03125
    %v1321 = vmul.f32 %v1317, 0.03125
    %v1322 = vadd.f32 %v1318, 1e-05
    %v1323 = vadd.f32 %v1319, 1e-05
    %v1324 = vadd.f32 %v1320, 1e-05
    %v1325 = vadd.f32 %v1321, 1e-05
    %v1326 = vrsqrt.pop %v1322
    %v1327 = vmul.f32 %v1326, %v1322
    %v1328 = vmul.f32 %v1327, %v1326
    %v1329 = vmul.f32 0.5, %v1328
    %v1330 = vsub.f32 1.5, %v1329
    %v1331 = vmul.f32 %v1326, %v1330
    %vm1332 = vweird.f32 %v1322
    %vm1333 = vweird.f32 %v1326
    %vm1334 = vmor %vm1332, %vm1333
    %v1335 = vsel %vm1334, %v1326, %v1331
    %v1336 = vrsqrt.pop %v1323
    %v1337 = vmul.f32 %v1336, %v1323
    %v1338 = vmul.f32 %v1337, %v1336
    %v1339 = vmul.f32 0.5, %v1338
    %v1340 = vsub.f32 1.5, %v1339
    %v1341 = vmul.f32 %v1336, %v1340
    %vm1342 = vweird.f32 %v1323
    %vm1343 = vweird.f32 %v1336
    %vm1344 = vmor %vm1342, %vm1343
    %v1345 = vsel %vm1344, %v1336, %v1341
    %v1346 = vrsqrt.pop %v1324
    %v1347 = vmul.f32 %v1346, %v1324
    %v1348 = vmul.f32 %v1347, %v1346
    %v1349 = vmul.f32 0.5, %v1348
    %v1350 = vsub.f32 1.5, %v1349
    %v1351 = vmul.f32 %v1346, %v1350
    %vm1352 = vweird.f32 %v1324
    %vm1353 = vweird.f32 %v1346
    %vm1354 = vmor %vm1352, %vm1353
    %v1355 = vsel %vm1354, %v1346, %v1351
    %v1356 = vrsqrt.pop %v1325
    %v1357 = vmul.f32 %v1356, %v1325
    %v1358 = vmul.f32 %v1357, %v1356
    %v1359 = vmul.f32 0.5, %v1358
    %v1360 = vsub.f32 1.5, %v1359
    %v1361 = vmul.f32 %v1356, %v1360
    %vm1362 = vweird.f32 %v1325
    %vm1363 = vweird.f32 %v1356
    %vm1364 = vmor %vm1362, %vm1363
    %v1365 = vsel %vm1364, %v1356, %v1361
    %v1366 = vmul.f32 %v1335, %v100
    %v1367 = vmul.f32 %v1345, %v101
    %v1368 = vmul.f32 %v1355, %v102
    %v1369 = vmul.f32 %v1365, %v103
    %1371 = vset.pattern.permute.xlu0 0
    %1372 = vperm.xlu0 %1371, %v1366
    %v1373 = vpop.permute.xlu0 %1372
    %1376 = vset.pattern.permute.xlu0 0
    %1377 = vperm.xlu0 %1376, %v1367
    %v1378 = vpop.permute.xlu0 %1377
    %1381 = vset.pattern.permute.xlu0 0
    %1382 = vperm.xlu0 %1381, %v1368
    %v1383 = vpop.permute.xlu0 %1382
    %1386 = vset.pattern.permute.xlu0 0
    %1387 = vperm.xlu0 %1386, %v1369
    %v1388 = vpop.permute.xlu0 %1387
    %v1390 = vmul.f32 %v1273, %v1373
    %v1391 = vmul.f32 %v1275, %v1378
    %v1392 = vmul.f32 %v1278, %v1383
    %v1393 = vmul.f32 %v1280, %v1388
    %v1394 = vmul.f32 %v1294, %v1366
    %v1395 = vmul.f32 %v1295, %v1367
    %v1396 = vmul.f32 %v1296, %v1368
    %v1397 = vmul.f32 %v1297, %v1369
    %v1398 = vsub.f32 %v104, %v1394
    %v1399 = vsub.f32 %v105, %v1395
    %v1400 = vsub.f32 %v106, %v1396
    %v1401 = vsub.f32 %v107, %v1397
    %1403 = vset.pattern.permute.xlu0 0
    %1404 = vperm.xlu0 %1403, %v1398
    %v1405 = vpop.permute.xlu0 %1404
    %1408 = vset.pattern.permute.xlu0 0
    %1409 = vperm.xlu0 %1408, %v1399
    %v1410 = vpop.permute.xlu0 %1409
    %1413 = vset.pattern.permute.xlu0 0
    %1414 = vperm.xlu0 %1413, %v1400
    %v1415 = vpop.permute.xlu0 %1414
    %1418 = vset.pattern.permute.xlu0 0
    %1419 = vperm.xlu0 %1418, %v1401
    %v1420 = vpop.permute.xlu0 %1419
    %v1422 = vadd.f32 %v1390, %v1405
    %v1423 = vadd.f32 %v1391, %v1410
    %v1424 = vadd.f32 %v1392, %v1415
    %v1425 = vadd.f32 %v1393, %v1420
    %v1426 = vadd.f32 %v1422, %v860
    %v1427 = vadd.f32 %v1423, %v861
    %v1428 = vadd.f32 %v1424, %v862
    %v1429 = vadd.f32 %v1425, %v863
    %1430 = vrot.lane.b32.xlu0 %v1426, 127
    %v1431 = vpop.permute.xlu0 %1430
    %1432 = vrot.lane.b32.xlu0 %v1427, 127
    %v1433 = vpop.permute.xlu0 %1432
    %1434 = vrot.lane.b32.xlu0 %v1428, 127
    %v1435 = vpop.permute.xlu0 %1434
    %1436 = vrot.lane.b32.xlu0 %v1429, 127
    %v1437 = vpop.permute.xlu0 %1436
    %v1438 = vmax.f32 %v1426, %v1431
    %v1439 = vmax.f32 %v1427, %v1433
    %v1440 = vmax.f32 %v1428, %v1435
    %v1441 = vmax.f32 %v1429, %v1437
    %1442 = vst [vmem:[#allocation2] sm:$0xff] %v1438
    %1443 = vst [vmem:[#allocation2 + $0x8] sm:$0xff] %v1439
    %1444 = vst [vmem:[#allocation2 + $0x10] sm:$0xff] %v1440
    %1445 = vst [vmem:[#allocation2 + $0x18] sm:$0xff] %v1441
    // Predicated region
    $region18: #{tpu_custom_call.1} parent=1 // pred_check
      _
    $region19: #{tpu_custom_call.1} parent=1 // pred_check_branch
      %1447 = sbr.rel (0) target = $region21
    $region20: #{tpu_custom_call.1} parent=1 // pred_region
      %1449 = vsyncadd [#allocation3], 0
      %s1450 = sshll.u32 [#allocation2], 4
      %s1451 = int_to_ptr.vmem [resolvable:$true] %s1450
      %s1452 = sshll.u32 %s4, 4
      %s1453 = int_to_ptr.hbm [resolvable:$true] %s1452
      %1458 = dma.vmem_to_hbm [thread:$0]  %s1451, 512, %s1453, [#allocation3], 128, 128, 8
    $region21: #{tpu_custom_call.1} parent=1 // pred_fallthru
      _
    // Predicated region
    $region22: #{tpu_custom_call.1} parent=1 // pred_check
      _
    $region23: #{tpu_custom_call.1} parent=1 // pred_check_branch
      %1460 = sbr.rel (0) target = $region25
    $region24: #{tpu_custom_call.1} parent=1 // pred_region
      %1462 = dma.done [#allocation3], 512
    $region25: #{tpu_custom_call.1} parent=1 // pred_fallthru
      _
    %1463 = vsyncpa [#allocation3], 1

</llo_original>
